<compile_context>
chip_gen: v5e
topology: v5e:2x2
jax: 0.10.0
libtpu: 0.0.40
codegen_flags: <defaults>
</compile_context>

<pallas_src>
import jax
import jax.numpy as jnp
from jax import lax
from jax.experimental import pallas as pl
from jax.experimental.pallas import tpu as pltpu


def _round_up(x, m):
    return (x + m - 1) // m * m


def _vmem_budget_bytes(frac=0.8):
    """~80% of this generation's VMEM capacity (review: v7x=~51MiB, v6e/v5e=~102MiB)."""
    try:
        cap = getattr(pltpu.get_tpu_info(), "vmem_capacity_bytes", None)
        if cap:
            return int(cap * frac)
    except Exception:
        pass
    return 48 * 1024 * 1024  # conservative fallback that fits v7x's 64 MiB/TC


def _estimate_vmem_bytes(TH, W, Cin, K9, Cp4, cdt, odt):
    """Footprint of one grid step (double-buffered blocks + scratch + dot result)."""
    csz = jnp.dtype(cdt).itemsize
    osz = jnp.dtype(odt).itemsize
    lane = lambda n: _round_up(n, 128)
    sub = lambda n: _round_up(n, 8)
    band = 2 * (TH + 2) * sub(W + 2) * lane(Cin) * csz   # input band, lane-padded minor dim
    wts = 2 * sub(K9) * lane(Cp4) * csz                  # resident folded weights
    im = TH * sub(W) * lane(K9) * csz                    # im2col VMEM scratch
    acc = sub(TH * W) * lane(Cp4) * 4                    # f32 dot result before cast
    outb = 2 * sub(TH * W) * lane(Cp4) * osz             # output tile
    return band + wts + im + acc + outb


def _pick_row_tile(H, W, Cin, K9, Cp4, cdt, odt, target_pixels, budget):
    """Largest divisor of H with TH*W <= target_pixels whose VMEM estimate fits the budget."""
    best = 1
    for th in range(1, H + 1):
        if H % th:
            continue
        within_target = (th * W <= target_pixels) or th == 1
        if within_target and _estimate_vmem_bytes(th, W, Cin, K9, Cp4, cdt, odt) <= budget:
            best = th
    return best


def _deconv_kernel(x_ref, w_ref, o_ref, im_ref):
    # x_ref:  (1, TH+2, W+2, Cin)   halo'd row band of the zero-padded NHWC image.
    # w_ref:  (9*Cin, Cp4)          polyphase-folded, zero-embedded weights (resident).
    # o_ref:  (1, TH*W, Cp4)        per original pixel -> (2x2 phases * Cout, lane-padded).
    # im_ref: (TH, W, 9*Cin)        im2col VMEM scratch (review item 1).
    TH = x_ref.shape[1] - 2
    Wc = x_ref.shape[2] - 2
    Cin = x_ref.shape[3]
    K9 = w_ref.shape[0]

    # Build the im2col tile: 9 static shifted taps packed along the K axis.
    for r in range(3):
        rows = x_ref[0, r:r + TH, :, :]                       # (TH, W+2, Cin), one load per row tap
        for s in range(3):
            k0 = (r * 3 + s) * Cin
            im_ref[:, :, k0:k0 + Cin] = rows[:, s:s + Wc, :]  # static lane-offset store

    # Single MXU matmul; K-accumulation happens inside the MXU pipeline (no VMEM RMW passes).
    lhs = im_ref[...].reshape(TH * Wc, K9)
    res = jnp.dot(lhs, w_ref[...], preferred_element_type=jnp.float32)
    o_ref[0, :, :] = res.astype(o_ref.dtype)


def deconv_layer_forward(x_nchw, weight_oihw, bias=None, *,
                         compute_dtype=jnp.bfloat16, out_dtype=jnp.float32,
                         target_tile_pixels=8192, nhwc_out=False):
    """Equivalent of DeConvLayer.forward: F.interpolate(x, scale_factor=2) (nearest) then
    Conv2d(kernel_size=3, padding=1). Pass compute_dtype=jnp.float32 for full-f32 math,
    out_dtype=jnp.bfloat16 / nhwc_out=True if the consumer allows (halves HBM writes, skips
    the NCHW transpose)."""
    N, Cin, H, W = x_nchw.shape
    Cout, Cin_w, KH, KW = weight_oihw.shape
    assert (Cin_w, KH, KW) == (Cin, 3, 3)
    K9 = 9 * Cin

    # Polyphase fold: nearest-x2 upsample + 3x3/pad-1 conv == four 2x2 filters on the ORIGINAL
    # grid; zero-embed them into one (9*Cin, 4*Cout) matrix acting on a 3x3 patch basis so the
    # 4x upsampled activation is never materialized.  S[a, k, r] = 1 iff conv row-tap k of output
    # phase a reads original-row offset (r - 1); same mapping for columns with phase b.
    S = jnp.array([[[1, 0, 0], [0, 1, 0], [0, 1, 0]],    # phase a = 0
                   [[0, 1, 0], [0, 1, 0], [0, 0, 1]]],   # phase a = 1
                  dtype=jnp.float32)
    w_kkic = jnp.transpose(weight_oihw.astype(jnp.float32), (2, 3, 1, 0))   # (ky, kx, Cin, Cout)
    wc = jnp.einsum('akr,bls,klco->rscabo', S, S, w_kkic).reshape(K9, 4 * Cout)
    Cp4 = _round_up(4 * Cout, 128)                       # lane-dense weight/output columns
    wc = jnp.pad(wc, ((0, 0), (0, Cp4 - 4 * Cout))).astype(compute_dtype)

    # Small-tensor glue: NCHW -> NHWC + zero pad by 1 (input traffic is tiny vs output).
    xp = jnp.transpose(x_nchw, (0, 2, 3, 1)).astype(compute_dtype)
    xp = jnp.pad(xp, ((0, 0), (1, 1), (1, 1), (0, 0)))

    budget = _vmem_budget_bytes()
    TH = _pick_row_tile(H, W, Cin, K9, Cp4, compute_dtype, out_dtype, target_tile_pixels, budget)
    nb = H // TH
    M = TH * W

    # Halo'd row bands (band t holds padded rows [t*TH, t*TH + TH + 2)): every grid step DMAs only
    # its own band, so VMEM is bounded independent of H*W and both TCs can split the grid freely.
    bands = jnp.stack([xp[:, t * TH:t * TH + TH + 2] for t in range(nb)], axis=1)
    bands = bands.reshape(N * nb, TH + 2, W + 2, Cin)
    NB = N * nb

    vmem_est = _estimate_vmem_bytes(TH, W, Cin, K9, Cp4, compute_dtype, out_dtype)
    vmem_limit = int(min(budget, max(16 * 1024 * 1024, 2 * vmem_est)))

    in_bytes = bands.size * bands.dtype.itemsize + wc.size * wc.dtype.itemsize
    out_bytes = NB * M * Cp4 * jnp.dtype(out_dtype).itemsize

    out = pl.pallas_call(
        _deconv_kernel,
        out_shape=jax.ShapeDtypeStruct((NB, M, Cp4), out_dtype),
        grid_spec=pltpu.PrefetchScalarGridSpec(
            num_scalar_prefetch=0,
            grid=(NB,),
            in_specs=[
                # one halo'd band per grid step (bounded VMEM; no whole-image residency)
                pl.BlockSpec((1, TH + 2, W + 2, Cin), lambda g: (g, 0, 0, 0)),
                # folded weights: same block every step -> resident in VMEM
                pl.BlockSpec((K9, Cp4), lambda g: (0, 0)),
            ],
            out_specs=pl.BlockSpec((1, M, Cp4), lambda g: (g, 0, 0)),
            scratch_shapes=[pltpu.VMEM((TH, W, K9), compute_dtype)],
        ),
        compiler_params=pltpu.CompilerParams(
            dimension_semantics=("parallel",),
            vmem_limit_bytes=vmem_limit,
        ),
        cost_estimate=pl.CostEstimate(
            flops=2 * NB * M * K9 * Cp4,
            transcendentals=0,
            bytes_accessed=in_bytes + out_bytes,
        ),
    )(bands, wc)                                          # (NB, TH*W, Cp4)

    # Drop channel padding, scatter the 2x2 phases onto the upsampled grid.
    out = out[:, :, :4 * Cout].reshape(N, nb, TH, W, 2, 2, Cout)   # (N,t,i,j,a,b,Cout)
    if bias is not None:
        out = out + bias.astype(out.dtype)
    if nhwc_out:
        return jnp.transpose(out, (0, 1, 2, 4, 3, 5, 6)).reshape(N, 2 * H, 2 * W, Cout)
    return jnp.transpose(out, (0, 6, 1, 2, 4, 3, 5)).reshape(N, Cout, 2 * H, 2 * W)


if __name__ == "__main__":
    key = jax.random.PRNGKey(0)
    k1, k2 = jax.random.split(key)

    # Small shapes; Cout=32 makes the phase-channel dim exactly 128 (fully lane-dense output).
    N, Cin, H, W, Cout = 2, 8, 16, 16, 32
    x = jax.random.normal(k1, (N, Cin, H, W), dtype=jnp.float32)

    fan_in = Cin * 3 * 3
    bound = 1.0 / (fan_in ** 0.5)
    w = jax.random.uniform(
        k2, (Cout, Cin, 3, 3), minval=-bound, maxval=bound, dtype=jnp.float32
    )

    # Reference: nearest-x2 upsample + conv on the same bf16-rounded operands, f32 math.
    xq = x.astype(jnp.bfloat16).astype(jnp.float32)
    wq = w.astype(jnp.bfloat16).astype(jnp.float32)
    x_up = jnp.repeat(jnp.repeat(xq, 2, axis=2), 2, axis=3)
    y_ref = lax.conv_general_dilated(
        x_up, wq, window_strides=(1, 1), padding=((1, 1), (1, 1)),
        dimension_numbers=("NCHW", "OIHW", "NCHW"),
        precision=lax.Precision.HIGHEST,
    )

    # 1) default tiling (whole image as one band)
    fwd = jax.jit(deconv_layer_forward)
    y = jax.block_until_ready(fwd(x, w))
    assert y.shape == (N, Cout, 2 * H, 2 * W), y.shape
    err = float(jnp.max(jnp.abs(y - y_ref)))
    assert jnp.allclose(y, y_ref, atol=1e-2, rtol=1e-2), err

    # 2) force the multi-band (halo'd row tile) path
    fwd_bands = jax.jit(lambda a, b: deconv_layer_forward(a, b, target_tile_pixels=64))
    y2 = jax.block_until_ready(fwd_bands(x, w))
    err2 = float(jnp.max(jnp.abs(y2 - y_ref)))
    assert jnp.allclose(y2, y_ref, atol=1e-2, rtol=1e-2), err2

    print("KERNEL_OK")
</pallas_src>

<mosaic_0001>
module attributes {stable_mosaic.version = 11 : i64} {
  func.func @_deconv_kernel(%arg0: i32, %arg1: memref<1x18x18x8xbf16, #tpu.memory_space<vmem>>, %arg2: memref<72x128xbf16, #tpu.memory_space<vmem>>, %arg3: memref<1x256x128xf32, #tpu.memory_space<vmem>>, %arg4: memref<16x16x72xbf16, #tpu.memory_space<vmem>>) attributes {dimension_semantics = [#tpu.dimension_semantics<parallel>], iteration_bounds = array<i64: 2>, scalar_prefetch = 0 : i64, scratch_operands = 1 : i64, tpu.core_type = #tpu.core_type<tc>, window_params = [{transform_indices = @transform_0, window_bounds = array<i64: 1, 18, 18, 8>}, {pipeline_mode = #tpu.pipeline_mode<synchronous>, transform_indices = @transform_1, window_bounds = array<i64: 72, 128>}, {transform_indices = @transform_2, window_bounds = array<i64: 1, 256, 128>}]} {
    %c0 = arith.constant 0 : index
    %c0_0 = arith.constant 0 : index
    %c0_1 = arith.constant 0 : index
    %c0_2 = arith.constant 0 : index
    %0 = vector.load %arg1[%c0, %c0_0, %c0_1, %c0_2] : memref<1x18x18x8xbf16, #tpu.memory_space<vmem>>, vector<1x16x18x8xbf16>
    %1 = vector.shape_cast %0 : vector<1x16x18x8xbf16> to vector<16x18x8xbf16>
    %2 = vector.extract_strided_slice %1 {offsets = [0, 0, 0], sizes = [16, 16, 8], strides = [1, 1, 1]} : vector<16x18x8xbf16> to vector<16x16x8xbf16>
    %c0_3 = arith.constant 0 : index
    %c0_4 = arith.constant 0 : index
    %c0_5 = arith.constant 0 : index
    %3 = vector.load %arg4[%c0_3, %c0_4, %c0_5] : memref<16x16x72xbf16, #tpu.memory_space<vmem>>, vector<16x16x8xbf16>
    tpu.vector_store %arg4[%c0_3, %c0_4, %c0_5], %2 {strides = array<i32>} : memref<16x16x72xbf16, #tpu.memory_space<vmem>>, vector<16x16x8xbf16>,
    %4 = vector.extract_strided_slice %1 {offsets = [0, 1, 0], sizes = [16, 16, 8], strides = [1, 1, 1]} : vector<16x18x8xbf16> to vector<16x16x8xbf16>
    %c0_6 = arith.constant 0 : index
    %c0_7 = arith.constant 0 : index
    %c8 = arith.constant 8 : index
    %5 = vector.load %arg4[%c0_6, %c0_7, %c8] : memref<16x16x72xbf16, #tpu.memory_space<vmem>>, vector<16x16x8xbf16>
    tpu.vector_store %arg4[%c0_6, %c0_7, %c8], %4 {strides = array<i32>} : memref<16x16x72xbf16, #tpu.memory_space<vmem>>, vector<16x16x8xbf16>,
    %6 = vector.extract_strided_slice %1 {offsets = [0, 2, 0], sizes = [16, 16, 8], strides = [1, 1, 1]} : vector<16x18x8xbf16> to vector<16x16x8xbf16>
    %c0_8 = arith.constant 0 : index
    %c0_9 = arith.constant 0 : index
    %c16 = arith.constant 16 : index
    %7 = vector.load %arg4[%c0_8, %c0_9, %c16] : memref<16x16x72xbf16, #tpu.memory_space<vmem>>, vector<16x16x8xbf16>
    tpu.vector_store %arg4[%c0_8, %c0_9, %c16], %6 {strides = array<i32>} : memref<16x16x72xbf16, #tpu.memory_space<vmem>>, vector<16x16x8xbf16>,
    %c0_10 = arith.constant 0 : index
    %c1 = arith.constant 1 : index
    %c0_11 = arith.constant 0 : index
    %c0_12 = arith.constant 0 : index
    %8 = vector.load %arg1[%c0_10, %c1, %c0_11, %c0_12] : memref<1x18x18x8xbf16, #tpu.memory_space<vmem>>, vector<1x16x18x8xbf16>
    %9 = vector.shape_cast %8 : vector<1x16x18x8xbf16> to vector<16x18x8xbf16>
    %10 = vector.extract_strided_slice %9 {offsets = [0, 0, 0], sizes = [16, 16, 8], strides = [1, 1, 1]} : vector<16x18x8xbf16> to vector<16x16x8xbf16>
    %c0_13 = arith.constant 0 : index
    %c0_14 = arith.constant 0 : index
    %c24 = arith.constant 24 : index
    %11 = vector.load %arg4[%c0_13, %c0_14, %c24] : memref<16x16x72xbf16, #tpu.memory_space<vmem>>, vector<16x16x8xbf16>
    tpu.vector_store %arg4[%c0_13, %c0_14, %c24], %10 {strides = array<i32>} : memref<16x16x72xbf16, #tpu.memory_space<vmem>>, vector<16x16x8xbf16>,
    %12 = vector.extract_strided_slice %9 {offsets = [0, 1, 0], sizes = [16, 16, 8], strides = [1, 1, 1]} : vector<16x18x8xbf16> to vector<16x16x8xbf16>
    %c0_15 = arith.constant 0 : index
    %c0_16 = arith.constant 0 : index
    %c32 = arith.constant 32 : index
    %13 = vector.load %arg4[%c0_15, %c0_16, %c32] : memref<16x16x72xbf16, #tpu.memory_space<vmem>>, vector<16x16x8xbf16>
    tpu.vector_store %arg4[%c0_15, %c0_16, %c32], %12 {strides = array<i32>} : memref<16x16x72xbf16, #tpu.memory_space<vmem>>, vector<16x16x8xbf16>,
    %14 = vector.extract_strided_slice %9 {offsets = [0, 2, 0], sizes = [16, 16, 8], strides = [1, 1, 1]} : vector<16x18x8xbf16> to vector<16x16x8xbf16>
    %c0_17 = arith.constant 0 : index
    %c0_18 = arith.constant 0 : index
    %c40 = arith.constant 40 : index
    %15 = vector.load %arg4[%c0_17, %c0_18, %c40] : memref<16x16x72xbf16, #tpu.memory_space<vmem>>, vector<16x16x8xbf16>
    tpu.vector_store %arg4[%c0_17, %c0_18, %c40], %14 {strides = array<i32>} : memref<16x16x72xbf16, #tpu.memory_space<vmem>>, vector<16x16x8xbf16>,
    %c0_19 = arith.constant 0 : index
    %c2 = arith.constant 2 : index
    %c0_20 = arith.constant 0 : index
    %c0_21 = arith.constant 0 : index
    %16 = vector.load %arg1[%c0_19, %c2, %c0_20, %c0_21] : memref<1x18x18x8xbf16, #tpu.memory_space<vmem>>, vector<1x16x18x8xbf16>
    %17 = vector.shape_cast %16 : vector<1x16x18x8xbf16> to vector<16x18x8xbf16>
    %18 = vector.extract_strided_slice %17 {offsets = [0, 0, 0], sizes = [16, 16, 8], strides = [1, 1, 1]} : vector<16x18x8xbf16> to vector<16x16x8xbf16>
    %c0_22 = arith.constant 0 : index
    %c0_23 = arith.constant 0 : index
    %c48 = arith.constant 48 : index
    %19 = vector.load %arg4[%c0_22, %c0_23, %c48] : memref<16x16x72xbf16, #tpu.memory_space<vmem>>, vector<16x16x8xbf16>
    tpu.vector_store %arg4[%c0_22, %c0_23, %c48], %18 {strides = array<i32>} : memref<16x16x72xbf16, #tpu.memory_space<vmem>>, vector<16x16x8xbf16>,
    %20 = vector.extract_strided_slice %17 {offsets = [0, 1, 0], sizes = [16, 16, 8], strides = [1, 1, 1]} : vector<16x18x8xbf16> to vector<16x16x8xbf16>
    %c0_24 = arith.constant 0 : index
    %c0_25 = arith.constant 0 : index
    %c56 = arith.constant 56 : index
    %21 = vector.load %arg4[%c0_24, %c0_25, %c56] : memref<16x16x72xbf16, #tpu.memory_space<vmem>>, vector<16x16x8xbf16>
    tpu.vector_store %arg4[%c0_24, %c0_25, %c56], %20 {strides = array<i32>} : memref<16x16x72xbf16, #tpu.memory_space<vmem>>, vector<16x16x8xbf16>,
    %22 = vector.extract_strided_slice %17 {offsets = [0, 2, 0], sizes = [16, 16, 8], strides = [1, 1, 1]} : vector<16x18x8xbf16> to vector<16x16x8xbf16>
    %c0_26 = arith.constant 0 : index
    %c0_27 = arith.constant 0 : index
    %c64 = arith.constant 64 : index
    %23 = vector.load %arg4[%c0_26, %c0_27, %c64] : memref<16x16x72xbf16, #tpu.memory_space<vmem>>, vector<16x16x8xbf16>
    tpu.vector_store %arg4[%c0_26, %c0_27, %c64], %22 {strides = array<i32>} : memref<16x16x72xbf16, #tpu.memory_space<vmem>>, vector<16x16x8xbf16>,
    %c0_28 = arith.constant 0 : index
    %c0_29 = arith.constant 0 : index
    %c0_30 = arith.constant 0 : index
    %24 = vector.load %arg4[%c0_28, %c0_29, %c0_30] : memref<16x16x72xbf16, #tpu.memory_space<vmem>>, vector<16x16x72xbf16>
    %25 = vector.shape_cast %24 : vector<16x16x72xbf16> to vector<256x72xbf16>
    %c0_31 = arith.constant 0 : index
    %c0_32 = arith.constant 0 : index
    %26 = vector.load %arg2[%c0_31, %c0_32] : memref<72x128xbf16, #tpu.memory_space<vmem>>, vector<72x128xbf16>
    %cst = arith.constant dense<0.000000e+00> : vector<256x128xf32>
    %27 = tpu.matmul %25, %26, %cst {dimension_numbers = #tpu.dot_dimension_numbers<[1], [0], [0], [1], [0, 0, 1, 1], [], []>} : vector<256x72xbf16>, vector<72x128xbf16>, vector<256x128xf32> -> vector<256x128xf32>
    %c0_33 = arith.constant 0 : index
    %c0_34 = arith.constant 0 : index
    %c0_35 = arith.constant 0 : index
    %28 = vector.load %arg3[%c0_33, %c0_34, %c0_35] : memref<1x256x128xf32, #tpu.memory_space<vmem>>, vector<1x256x128xf32>
    %29 = vector.shape_cast %28 : vector<1x256x128xf32> to vector<256x128xf32>
    %30 = vector.shape_cast %27 : vector<256x128xf32> to vector<1x256x128xf32>
    tpu.vector_store %arg3[%c0_33, %c0_34, %c0_35], %30 {strides = array<i32>} : memref<1x256x128xf32, #tpu.memory_space<vmem>>, vector<1x256x128xf32>,
    return
  }
  func.func @transform_0(%arg0: i32) -> (i32, i32, i32, i32) {
    %c0_i32 = arith.constant 0 : i32
    %c0_i32_0 = arith.constant 0 : i32
    %c0_i32_1 = arith.constant 0 : i32
    %c0_i32_2 = arith.constant 0 : i32
    return %arg0, %c0_i32, %c0_i32_0, %c0_i32_1 : i32, i32, i32, i32
  }
  func.func @transform_1(%arg0: i32) -> (i32, i32) {
    %c0_i32 = arith.constant 0 : i32
    %c0_i32_0 = arith.constant 0 : i32
    %c0_i32_1 = arith.constant 0 : i32
    return %c0_i32, %c0_i32_0 : i32, i32
  }
  func.func @transform_2(%arg0: i32) -> (i32, i32, i32) {
    %c0_i32 = arith.constant 0 : i32
    %c0_i32_0 = arith.constant 0 : i32
    %c0_i32_1 = arith.constant 0 : i32
    return %arg0, %c0_i32, %c0_i32_0 : i32, i32, i32
  }
}

</mosaic_0001>

<llo_original>
// kernel: deconv_layer_forward.1
$region0: #{deconv_layer_forward.1}
  #allocation0 [shape = 'u32[]', space=smem, size = 0x4, offset = 0x4, fixed_abs, tag = 'smem constant byte address 0x4 - core index']
  #allocation1 [shape = 'u32[72,128]{1,0:T(1,128)}', space=vmem, size = 0x9000, scoped, tag = 'internal scratch']
  #allocation2 [shape = 'bf16[16,16,72]{2,1,0:T(8,128)(2,1)}', space=vmem, size = 0x10000, scoped, tag = 'scratch operand']
  %s0 = inlined_call_operand.vmem [shape: bf16[2,18,18,8], index: 0, kind: input, shape index: {}]
  %s1 = inlined_call_operand.vmem [shape: bf16[72,128], index: 1, kind: input, shape index: {}]
  %s2 = inlined_call_operand.vmem [shape: f32[2,256,128], index: 2, kind: output, shape index: {}]
  %s3 = sld [smem:[#allocation0]]
  $region41: #{deconv_layer_forward.1} parent=0
    _
  %s5 = ssub.s32 1, %s3
  %s6 = scalar_select 0, %s5, %s3
  loop: start=0, step=1, limit=4
  $region2: #{deconv_layer_forward.1} parent=0 // loop_pre_header
    _
  $region3: #{deconv_layer_forward.1} parent=0 // loop_header
    %s8 = sphi 0, %s12
    %p9 = scmp.ge.s32.totalorder %s8, 4
    %s18 = sphi 0, %s20
    %s21 = sphi 0, %s18
    %s22 = sphi 0, %s21
    %s38 = sphi 0, %s22
    %s42 = sphi 0, %s42
    %s44 = sphi 0, %s42
    %s45 = sphi 0, %s44
    %s59 = sphi 0, %s45
    %s65 = sphi 0, %s67
    %s68 = sphi 0, %s65
    %s69 = sphi 0, %s68
    %s85 = sphi 0, %s69
  $region4: #{deconv_layer_forward.1} parent=0 // loop_header_branch
    %11 = sbr.rel (%p9) target = $region8
  $region5: #{deconv_layer_forward.1} parent=0 // loop_body
    %s13 = ssub.s32 %s8, 1
    %s14 = ssub.s32 %s8, 2
    %s15 = sadd.s32 %s8, 1
    %s16 = ssub.s32 %s8, %s15
    %p17 = scmp.eq.s32.totalorder %s16, 0
    %s19 = sadd.s32 %s18, 1
    %s20 = scalar_select %p17, %s18, %s19
    %p23 = pneg %p17
    %p24 = scmp.eq.s32.totalorder %s8, 1
    %p25 = por %p23, %p24
    %p26 = scmp.ne.s32.totalorder %s18, %s21
    %p27 = scmp.eq.s32.totalorder %s8, 0
    %p28 = por %p26, %p27
    %p29 = scmp.ne.s32.totalorder %s18, %s21
    %p30 = scmp.eq.s32.totalorder %s13, 1
    %p31 = por %p29, %p30
    %p32 = scmp.ne.s32.totalorder %s21, %s22
    %p33 = scmp.eq.s32.totalorder %s13, 0
    %p34 = por %p32, %p33
    %p35 = scmp.ne.s32.totalorder %s21, %s22
    %p36 = scmp.eq.s32.totalorder %s14, 1
    %p37 = por %p35, %p36
    %p39 = scmp.ne.s32.totalorder %s22, %s38
    %p40 = scmp.eq.s32.totalorder %s14, 0
    %p41 = por %p39, %p40
    %s43 = sadd.s32 %s42, 1
    %p46 = scmp.eq.s32.totalorder %s8, 1
    %p47 = scmp.ne.s32.totalorder %s42, %s44
    %p48 = scmp.eq.s32.totalorder %s8, 0
    %p49 = por %p47, %p48
    %p50 = scmp.ne.s32.totalorder %s42, %s44
    %p51 = scmp.eq.s32.totalorder %s13, 1
    %p52 = por %p50, %p51
    %p53 = scmp.ne.s32.totalorder %s44, %s45
    %p54 = scmp.eq.s32.totalorder %s13, 0
    %p55 = por %p53, %p54
    %p56 = scmp.ne.s32.totalorder %s44, %s45
    %p57 = scmp.eq.s32.totalorder %s14, 1
    %p58 = por %p56, %p57
    %p60 = scmp.ne.s32.totalorder %s45, %s59
    %p61 = scmp.eq.s32.totalorder %s14, 0
    %p62 = por %p60, %p61
    %s63 = ssub.s32 %s8, %s15
    %p64 = scmp.eq.s32.totalorder %s63, 0
    %s66 = sadd.s32 %s65, 1
    %s67 = scalar_select %p64, %s65, %s66
    %p70 = pneg %p64
    %p71 = scmp.eq.s32.totalorder %s8, 1
    %p72 = por %p70, %p71
    %p73 = scmp.ne.s32.totalorder %s65, %s68
    %p74 = scmp.eq.s32.totalorder %s8, 0
    %p75 = por %p73, %p74
    %p76 = scmp.ne.s32.totalorder %s65, %s68
    %p77 = scmp.eq.s32.totalorder %s13, 1
    %p78 = por %p76, %p77
    %p79 = scmp.ne.s32.totalorder %s68, %s69
    %p80 = scmp.eq.s32.totalorder %s13, 0
    %p81 = por %p79, %p80
    %p82 = scmp.ne.s32.totalorder %s68, %s69
    %p83 = scmp.eq.s32.totalorder %s14, 1
    %p84 = por %p82, %p83
    %p86 = scmp.ne.s32.totalorder %s69, %s85
    %p87 = scmp.eq.s32.totalorder %s14, 0
    %p88 = por %p86, %p87
    %p89 = scmp.le.s32.totalorder 1, %s8
    %p90 = scmp.lt.s32.totalorder %s8, 3
    %p91 = pnand %p89, %p90
    %p92 = pneg %p91
    // Predicated region
    $region9: #{deconv_layer_forward.1} parent=5 // pred_check
      _
    $region10: #{deconv_layer_forward.1} parent=5 // pred_check_branch
      %94 = sbr.rel (%p91) target = $region12
    $region11: #{deconv_layer_forward.1} parent=5 // pred_region
      %s95 = ssub.s32 %s8, 1
      // Predicated region
      $region13: #{deconv_layer_forward.1} parent=11 // pred_check
        %p96 = pneg %p55
      $region14: #{deconv_layer_forward.1} parent=11 // pred_check_branch
        %98 = sbr.rel (%p96) target = $region16
      $region15: #{deconv_layer_forward.1} parent=11 // pred_region
        _
      $region16: #{deconv_layer_forward.1} parent=11 // pred_fallthru
        _
    $region12: #{deconv_layer_forward.1} parent=5 // pred_fallthru
      _
    %p99 = scmp.lt.s32.totalorder %s8, 2
    // Predicated region
    $region17: #{deconv_layer_forward.1} parent=5 // pred_check
      %p100 = pneg %p99
    $region18: #{deconv_layer_forward.1} parent=5 // pred_check_branch
      %102 = sbr.rel (%p100) target = $region20
    $region19: #{deconv_layer_forward.1} parent=5 // pred_region
      // Predicated region
      $region21: #{deconv_layer_forward.1} parent=19 // pred_check
        %p103 = pneg %p28
      $region22: #{deconv_layer_forward.1} parent=19 // pred_check_branch
        %105 = sbr.rel (%p103) target = $region24
      $region23: #{deconv_layer_forward.1} parent=19 // pred_region
        %p106 = scmp.lt.s32.totalorder %s8, 1
        %s107 = scalar_select %p106, %s8, 1
        %s108 = smul.addr %s107, 54
        %s109 = smul.addr %s108, 4
        %s110 = scalar_lea.vmem %s0, %s109
      $region24: #{deconv_layer_forward.1} parent=19 // pred_fallthru
        _
    $region20: #{deconv_layer_forward.1} parent=5 // pred_fallthru
      _
    %p111 = scmp.le.s32.totalorder 1, %s8
    %p112 = scmp.lt.s32.totalorder %s8, 3
    %p113 = pnand %p111, %p112
    %p114 = pneg %p113
    // Predicated region
    $region25: #{deconv_layer_forward.1} parent=5 // pred_check
      _
    $region26: #{deconv_layer_forward.1} parent=5 // pred_check_branch
      %116 = sbr.rel (%p113) target = $region28
    $region27: #{deconv_layer_forward.1} parent=5 // pred_region
      %s117 = ssub.s32 %s8, 1
      %p118 = scmp.lt.s32.totalorder %s13, 1
      %s119 = scalar_select %p118, %s13, 1
      %s120 = smul.addr %s119, 54
      %s121 = smul.addr %s120, 4
      %s122 = scalar_lea.vmem %s0, %s121
      %p123 = pneg %p34
      %p124 = pneg %p31
      %p125 = pneg %p55
      %p126 = pneg %p52
      %p127 = pneg %p81
      %p128 = pneg %p78
      %p129 = scmp.lt.s32.totalorder %s13, 1
      %s130 = scalar_select %p129, %s13, 1
      %s131 = smul.addr %s130, 32
      %s132 = smul.addr %s131, 8
      %s133 = scalar_lea.vmem %s2, %s132
      %p134 = scmp.lt.s32.totalorder %s13, 1
      %s135 = scalar_select %p134, %s13, 1
      %s136 = smul.addr %s135, 54
      %s137 = smul.addr %s136, 4
      %s138 = scalar_lea.vmem %s0, %s137
      %p139 = scmp.lt.s32.totalorder %s13, 1
      %s140 = scalar_select %p139, %s13, 1
      %s141 = smul.addr %s140, 32
      %s142 = smul.addr %s141, 8
      %s143 = scalar_lea.vmem %s2, %s142
      %v145 = vld [vmem:[%s138] sm:$0xf]
      %v146 = vld [vmem:[%s138 + $0x4] sm:$0xf]
      %v147 = vld [vmem:[%s138 + $0x8] sm:$0x1]
      %v148 = vld [vmem:[%s138 + $0xc] sm:$0xf]
      %v149 = vld [vmem:[%s138 + $0x10] sm:$0xf]
      %v150 = vld [vmem:[%s138 + $0x14] sm:$0x1]
      %v151 = vld [vmem:[%s138 + $0x18] sm:$0xf]
      %v152 = vld [vmem:[%s138 + $0x1c] sm:$0xf]
      %v153 = vld [vmem:[%s138 + $0x20] sm:$0x1]
      %v154 = vld [vmem:[%s138 + $0x24] sm:$0xf]
      %v155 = vld [vmem:[%s138 + $0x28] sm:$0xf]
      %v156 = vld [vmem:[%s138 + $0x2c] sm:$0x1]
      %v157 = vld [vmem:[%s138 + $0x30] sm:$0xf]
      %v158 = vld [vmem:[%s138 + $0x34] sm:$0xf]
      %v159 = vld [vmem:[%s138 + $0x38] sm:$0x1]
      %v160 = vld [vmem:[%s138 + $0x3c] sm:$0xf]
      %v161 = vld [vmem:[%s138 + $0x40] sm:$0xf]
      %v162 = vld [vmem:[%s138 + $0x44] sm:$0x1]
      %v163 = vld [vmem:[%s138 + $0x48] sm:$0xf]
      %v164 = vld [vmem:[%s138 + $0x4c] sm:$0xf]
      %v165 = vld [vmem:[%s138 + $0x50] sm:$0x1]
      %v166 = vld [vmem:[%s138 + $0x54] sm:$0xf]
      %v167 = vld [vmem:[%s138 + $0x58] sm:$0xf]
      %v168 = vld [vmem:[%s138 + $0x5c] sm:$0x1]
      %v169 = vld [vmem:[%s138 + $0x60] sm:$0xf]
      %v170 = vld [vmem:[%s138 + $0x64] sm:$0xf]
      %v171 = vld [vmem:[%s138 + $0x68] sm:$0x1]
      %v172 = vld [vmem:[%s138 + $0x6c] sm:$0xf]
      %v173 = vld [vmem:[%s138 + $0x70] sm:$0xf]
      %v174 = vld [vmem:[%s138 + $0x74] sm:$0x1]
      %v175 = vld [vmem:[%s138 + $0x78] sm:$0xf]
      %v176 = vld [vmem:[%s138 + $0x7c] sm:$0xf]
      %v177 = vld [vmem:[%s138 + $0x80] sm:$0x1]
      %v178 = vld [vmem:[%s138 + $0x84] sm:$0xf]
      %v179 = vld [vmem:[%s138 + $0x88] sm:$0xf]
      %v180 = vld [vmem:[%s138 + $0x8c] sm:$0x1]
      %v181 = vld [vmem:[%s138 + $0x90] sm:$0xf]
      %v182 = vld [vmem:[%s138 + $0x94] sm:$0xf]
      %v183 = vld [vmem:[%s138 + $0x98] sm:$0x1]
      %v184 = vld [vmem:[%s138 + $0x9c] sm:$0xf]
      %v185 = vld [vmem:[%s138 + $0xa0] sm:$0xf]
      %v186 = vld [vmem:[%s138 + $0xa4] sm:$0x1]
      %v187 = vld [vmem:[%s138 + $0xa8] sm:$0xf]
      %v188 = vld [vmem:[%s138 + $0xac] sm:$0xf]
      %v189 = vld [vmem:[%s138 + $0xb0] sm:$0x1]
      %v190 = vld [vmem:[%s138 + $0xb4] sm:$0xf]
      %v191 = vld [vmem:[%s138 + $0xb8] sm:$0xf]
      %v192 = vld [vmem:[%s138 + $0xbc] sm:$0x1]
      %vm193 = vcmask 60416
      %194 = vst.msk [vmem:[#allocation2] sm:$0xf] %vm193, %v145
      %195 = vst.msk [vmem:[#allocation2 + $0x4] sm:$0xf] %vm193, %v146
      %196 = vst.msk [vmem:[#allocation2 + $0x8] sm:$0xf] %vm193, %v148
      %197 = vst.msk [vmem:[#allocation2 + $0xc] sm:$0xf] %vm193, %v149
      %198 = vst.msk [vmem:[#allocation2 + $0x10] sm:$0xf] %vm193, %v151
      %199 = vst.msk [vmem:[#allocation2 + $0x14] sm:$0xf] %vm193, %v152
      %200 = vst.msk [vmem:[#allocation2 + $0x18] sm:$0xf] %vm193, %v154
      %201 = vst.msk [vmem:[#allocation2 + $0x1c] sm:$0xf] %vm193, %v155
      %202 = vst.msk [vmem:[#allocation2 + $0x20] sm:$0xf] %vm193, %v157
      %203 = vst.msk [vmem:[#allocation2 + $0x24] sm:$0xf] %vm193, %v158
      %204 = vst.msk [vmem:[#allocation2 + $0x28] sm:$0xf] %vm193, %v160
      %205 = vst.msk [vmem:[#allocation2 + $0x2c] sm:$0xf] %vm193, %v161
      %206 = vst.msk [vmem:[#allocation2 + $0x30] sm:$0xf] %vm193, %v163
      %207 = vst.msk [vmem:[#allocation2 + $0x34] sm:$0xf] %vm193, %v164
      %208 = vst.msk [vmem:[#allocation2 + $0x38] sm:$0xf] %vm193, %v166
      %209 = vst.msk [vmem:[#allocation2 + $0x3c] sm:$0xf] %vm193, %v167
      %210 = vst.msk [vmem:[#allocation2 + $0x40] sm:$0xf] %vm193, %v169
      %211 = vst.msk [vmem:[#allocation2 + $0x44] sm:$0xf] %vm193, %v170
      %212 = vst.msk [vmem:[#allocation2 + $0x48] sm:$0xf] %vm193, %v172
      %213 = vst.msk [vmem:[#allocation2 + $0x4c] sm:$0xf] %vm193, %v173
      %214 = vst.msk [vmem:[#allocation2 + $0x50] sm:$0xf] %vm193, %v175
      %215 = vst.msk [vmem:[#allocation2 + $0x54] sm:$0xf] %vm193, %v176
      %216 = vst.msk [vmem:[#allocation2 + $0x58] sm:$0xf] %vm193, %v178
      %217 = vst.msk [vmem:[#allocation2 + $0x5c] sm:$0xf] %vm193, %v179
      %218 = vst.msk [vmem:[#allocation2 + $0x60] sm:$0xf] %vm193, %v181
      %219 = vst.msk [vmem:[#allocation2 + $0x64] sm:$0xf] %vm193, %v182
      %220 = vst.msk [vmem:[#allocation2 + $0x68] sm:$0xf] %vm193, %v184
      %221 = vst.msk [vmem:[#allocation2 + $0x6c] sm:$0xf] %vm193, %v185
      %222 = vst.msk [vmem:[#allocation2 + $0x70] sm:$0xf] %vm193, %v187
      %223 = vst.msk [vmem:[#allocation2 + $0x74] sm:$0xf] %vm193, %v188
      %224 = vst.msk [vmem:[#allocation2 + $0x78] sm:$0xf] %vm193, %v190
      %225 = vst.msk [vmem:[#allocation2 + $0x7c] sm:$0xf] %vm193, %v191
      %vm226 = vsmask.f32 3328
      %vm227 = vsmask.f32 7440
      %vm228 = vmor %vm226, %vm227
      %v230 = vshrl.u32 %v145, 16
      %v232 = vrot.slane %v230, 4
      %v233 = vshll.u32 %v145, 16
      %v235 = vrot.slane %v233, 5
      %v236 = vor.u32 %v232, %v235
      %v237 = vrot.slane %v236, 4
      %v239 = vshll.u32 %v146, 16
      %v241 = vrot.slane %v239, 5
      %v242 = vsel %vm228, %v237, %v241
      %v243 = vshrl.u32 %v146, 16
      %v245 = vrot.slane %v243, 4
      %v246 = vor.u32 %v245, %v241
      %v247 = vrot.slane %v246, 4
      %v249 = vshll.u32 %v147, 16
      %v251 = vrot.slane %v249, 5
      %v252 = vsel %vm228, %v247, %v251
      %v254 = vshrl.u32 %v148, 16
      %v256 = vrot.slane %v254, 4
      %v257 = vshll.u32 %v148, 16
      %v259 = vrot.slane %v257, 5
      %v260 = vor.u32 %v256, %v259
      %v261 = vrot.slane %v260, 4
      %v263 = vshll.u32 %v149, 16
      %v265 = vrot.slane %v263, 5
      %v266 = vsel %vm228, %v261, %v265
      %v267 = vshrl.u32 %v149, 16
      %v269 = vrot.slane %v267, 4
      %v270 = vor.u32 %v269, %v265
      %v271 = vrot.slane %v270, 4
      %v273 = vshll.u32 %v150, 16
      %v275 = vrot.slane %v273, 5
      %v276 = vsel %vm228, %v271, %v275
      %v278 = vshrl.u32 %v151, 16
      %v280 = vrot.slane %v278, 4
      %v281 = vshll.u32 %v151, 16
      %v283 = vrot.slane %v281, 5
      %v284 = vor.u32 %v280, %v283
      %v285 = vrot.slane %v284, 4
      %v287 = vshll.u32 %v152, 16
      %v289 = vrot.slane %v287, 5
      %v290 = vsel %vm228, %v285, %v289
      %v291 = vshrl.u32 %v152, 16
      %v293 = vrot.slane %v291, 4
      %v294 = vor.u32 %v293, %v289
      %v295 = vrot.slane %v294, 4
      %v297 = vshll.u32 %v153, 16
      %v299 = vrot.slane %v297, 5
      %v300 = vsel %vm228, %v295, %v299
      %v302 = vshrl.u32 %v154, 16
      %v304 = vrot.slane %v302, 4
      %v305 = vshll.u32 %v154, 16
      %v307 = vrot.slane %v305, 5
      %v308 = vor.u32 %v304, %v307
      %v309 = vrot.slane %v308, 4
      %v311 = vshll.u32 %v155, 16
      %v313 = vrot.slane %v311, 5
      %v314 = vsel %vm228, %v309, %v313
      %v315 = vshrl.u32 %v155, 16
      %v317 = vrot.slane %v315, 4
      %v318 = vor.u32 %v317, %v313
      %v319 = vrot.slane %v318, 4
      %v321 = vshll.u32 %v156, 16
      %v323 = vrot.slane %v321, 5
      %v324 = vsel %vm228, %v319, %v323
      %v326 = vshrl.u32 %v157, 16
      %v328 = vrot.slane %v326, 4
      %v329 = vshll.u32 %v157, 16
      %v331 = vrot.slane %v329, 5
      %v332 = vor.u32 %v328, %v331
      %v333 = vrot.slane %v332, 4
      %v335 = vshll.u32 %v158, 16
      %v337 = vrot.slane %v335, 5
      %v338 = vsel %vm228, %v333, %v337
      %v339 = vshrl.u32 %v158, 16
      %v341 = vrot.slane %v339, 4
      %v342 = vor.u32 %v341, %v337
      %v343 = vrot.slane %v342, 4
      %v345 = vshll.u32 %v159, 16
      %v347 = vrot.slane %v345, 5
      %v348 = vsel %vm228, %v343, %v347
      %v350 = vshrl.u32 %v160, 16
      %v352 = vrot.slane %v350, 4
      %v353 = vshll.u32 %v160, 16
      %v355 = vrot.slane %v353, 5
      %v356 = vor.u32 %v352, %v355
      %v357 = vrot.slane %v356, 4
      %v359 = vshll.u32 %v161, 16
      %v361 = vrot.slane %v359, 5
      %v362 = vsel %vm228, %v357, %v361
      %v363 = vshrl.u32 %v161, 16
      %v365 = vrot.slane %v363, 4
      %v366 = vor.u32 %v365, %v361
      %v367 = vrot.slane %v366, 4
      %v369 = vshll.u32 %v162, 16
      %v371 = vrot.slane %v369, 5
      %v372 = vsel %vm228, %v367, %v371
      %v374 = vshrl.u32 %v163, 16
      %v376 = vrot.slane %v374, 4
      %v377 = vshll.u32 %v163, 16
      %v379 = vrot.slane %v377, 5
      %v380 = vor.u32 %v376, %v379
      %v381 = vrot.slane %v380, 4
      %v383 = vshll.u32 %v164, 16
      %v385 = vrot.slane %v383, 5
      %v386 = vsel %vm228, %v381, %v385
      %v387 = vshrl.u32 %v164, 16
      %v389 = vrot.slane %v387, 4
      %v390 = vor.u32 %v389, %v385
      %v391 = vrot.slane %v390, 4
      %v393 = vshll.u32 %v165, 16
      %v395 = vrot.slane %v393, 5
      %v396 = vsel %vm228, %v391, %v395
      %v398 = vshrl.u32 %v166, 16
      %v400 = vrot.slane %v398, 4
      %v401 = vshll.u32 %v166, 16
      %v403 = vrot.slane %v401, 5
      %v404 = vor.u32 %v400, %v403
      %v405 = vrot.slane %v404, 4
      %v407 = vshll.u32 %v167, 16
      %v409 = vrot.slane %v407, 5
      %v410 = vsel %vm228, %v405, %v409
      %v411 = vshrl.u32 %v167, 16
      %v413 = vrot.slane %v411, 4
      %v414 = vor.u32 %v413, %v409
      %v415 = vrot.slane %v414, 4
      %v417 = vshll.u32 %v168, 16
      %v419 = vrot.slane %v417, 5
      %v420 = vsel %vm228, %v415, %v419
      %v422 = vshrl.u32 %v169, 16
      %v424 = vrot.slane %v422, 4
      %v425 = vshll.u32 %v169, 16
      %v427 = vrot.slane %v425, 5
      %v428 = vor.u32 %v424, %v427
      %v429 = vrot.slane %v428, 4
      %v431 = vshll.u32 %v170, 16
      %v433 = vrot.slane %v431, 5
      %v434 = vsel %vm228, %v429, %v433
      %v435 = vshrl.u32 %v170, 16
      %v437 = vrot.slane %v435, 4
      %v438 = vor.u32 %v437, %v433
      %v439 = vrot.slane %v438, 4
      %v441 = vshll.u32 %v171, 16
      %v443 = vrot.slane %v441, 5
      %v444 = vsel %vm228, %v439, %v443
      %v446 = vshrl.u32 %v172, 16
      %v448 = vrot.slane %v446, 4
      %v449 = vshll.u32 %v172, 16
      %v451 = vrot.slane %v449, 5
      %v452 = vor.u32 %v448, %v451
      %v453 = vrot.slane %v452, 4
      %v455 = vshll.u32 %v173, 16
      %v457 = vrot.slane %v455, 5
      %v458 = vsel %vm228, %v453, %v457
      %v459 = vshrl.u32 %v173, 16
      %v461 = vrot.slane %v459, 4
      %v462 = vor.u32 %v461, %v457
      %v463 = vrot.slane %v462, 4
      %v465 = vshll.u32 %v174, 16
      %v467 = vrot.slane %v465, 5
      %v468 = vsel %vm228, %v463, %v467
      %v470 = vshrl.u32 %v175, 16
      %v472 = vrot.slane %v470, 4
      %v473 = vshll.u32 %v175, 16
      %v475 = vrot.slane %v473, 5
      %v476 = vor.u32 %v472, %v475
      %v477 = vrot.slane %v476, 4
      %v479 = vshll.u32 %v176, 16
      %v481 = vrot.slane %v479, 5
      %v482 = vsel %vm228, %v477, %v481
      %v483 = vshrl.u32 %v176, 16
      %v485 = vrot.slane %v483, 4
      %v486 = vor.u32 %v485, %v481
      %v487 = vrot.slane %v486, 4
      %v489 = vshll.u32 %v177, 16
      %v491 = vrot.slane %v489, 5
      %v492 = vsel %vm228, %v487, %v491
      %v494 = vshrl.u32 %v178, 16
      %v496 = vrot.slane %v494, 4
      %v497 = vshll.u32 %v178, 16
      %v499 = vrot.slane %v497, 5
      %v500 = vor.u32 %v496, %v499
      %v501 = vrot.slane %v500, 4
      %v503 = vshll.u32 %v179, 16
      %v505 = vrot.slane %v503, 5
      %v506 = vsel %vm228, %v501, %v505
      %v507 = vshrl.u32 %v179, 16
      %v509 = vrot.slane %v507, 4
      %v510 = vor.u32 %v509, %v505
      %v511 = vrot.slane %v510, 4
      %v513 = vshll.u32 %v180, 16
      %v515 = vrot.slane %v513, 5
      %v516 = vsel %vm228, %v511, %v515
      %v518 = vshrl.u32 %v181, 16
      %v520 = vrot.slane %v518, 4
      %v521 = vshll.u32 %v181, 16
      %v523 = vrot.slane %v521, 5
      %v524 = vor.u32 %v520, %v523
      %v525 = vrot.slane %v524, 4
      %v527 = vshll.u32 %v182, 16
      %v529 = vrot.slane %v527, 5
      %v530 = vsel %vm228, %v525, %v529
      %v531 = vshrl.u32 %v182, 16
      %v533 = vrot.slane %v531, 4
      %v534 = vor.u32 %v533, %v529
      %v535 = vrot.slane %v534, 4
      %v537 = vshll.u32 %v183, 16
      %v539 = vrot.slane %v537, 5
      %v540 = vsel %vm228, %v535, %v539
      %v542 = vshrl.u32 %v184, 16
      %v544 = vrot.slane %v542, 4
      %v545 = vshll.u32 %v184, 16
      %v547 = vrot.slane %v545, 5
      %v548 = vor.u32 %v544, %v547
      %v549 = vrot.slane %v548, 4
      %v551 = vshll.u32 %v185, 16
      %v553 = vrot.slane %v551, 5
      %v554 = vsel %vm228, %v549, %v553
      %v555 = vshrl.u32 %v185, 16
      %v557 = vrot.slane %v555, 4
      %v558 = vor.u32 %v557, %v553
      %v559 = vrot.slane %v558, 4
      %v561 = vshll.u32 %v186, 16
      %v563 = vrot.slane %v561, 5
      %v564 = vsel %vm228, %v559, %v563
      %v566 = vshrl.u32 %v187, 16
      %v568 = vrot.slane %v566, 4
      %v569 = vshll.u32 %v187, 16
      %v571 = vrot.slane %v569, 5
      %v572 = vor.u32 %v568, %v571
      %v573 = vrot.slane %v572, 4
      %v575 = vshll.u32 %v188, 16
      %v577 = vrot.slane %v575, 5
      %v578 = vsel %vm228, %v573, %v577
      %v579 = vshrl.u32 %v188, 16
      %v581 = vrot.slane %v579, 4
      %v582 = vor.u32 %v581, %v577
      %v583 = vrot.slane %v582, 4
      %v585 = vshll.u32 %v189, 16
      %v587 = vrot.slane %v585, 5
      %v588 = vsel %vm228, %v583, %v587
      %v590 = vshrl.u32 %v190, 16
      %v592 = vrot.slane %v590, 4
      %v593 = vshll.u32 %v190, 16
      %v595 = vrot.slane %v593, 5
      %v596 = vor.u32 %v592, %v595
      %v597 = vrot.slane %v596, 4
      %v599 = vshll.u32 %v191, 16
      %v601 = vrot.slane %v599, 5
      %v602 = vsel %vm228, %v597, %v601
      %v603 = vshrl.u32 %v191, 16
      %v605 = vrot.slane %v603, 4
      %v606 = vor.u32 %v605, %v601
      %v607 = vrot.slane %v606, 4
      %v609 = vshll.u32 %v192, 16
      %v611 = vrot.slane %v609, 5
      %v612 = vsel %vm228, %v607, %v611
      %613 = vrot.lane.b32.xlu0 %v242, 8
      %v614 = vpop.permute.xlu0 %613
      %615 = vrot.lane.b32.xlu0 %v252, 8
      %v616 = vpop.permute.xlu0 %615
      %617 = vrot.lane.b32.xlu0 %v266, 8
      %v618 = vpop.permute.xlu0 %617
      %619 = vrot.lane.b32.xlu0 %v276, 8
      %v620 = vpop.permute.xlu0 %619
      %621 = vrot.lane.b32.xlu0 %v290, 8
      %v622 = vpop.permute.xlu0 %621
      %623 = vrot.lane.b32.xlu0 %v300, 8
      %v624 = vpop.permute.xlu0 %623
      %625 = vrot.lane.b32.xlu0 %v314, 8
      %v626 = vpop.permute.xlu0 %625
      %627 = vrot.lane.b32.xlu0 %v324, 8
      %v628 = vpop.permute.xlu0 %627
      %629 = vrot.lane.b32.xlu0 %v338, 8
      %v630 = vpop.permute.xlu0 %629
      %631 = vrot.lane.b32.xlu0 %v348, 8
      %v632 = vpop.permute.xlu0 %631
      %633 = vrot.lane.b32.xlu0 %v362, 8
      %v634 = vpop.permute.xlu0 %633
      %635 = vrot.lane.b32.xlu0 %v372, 8
      %v636 = vpop.permute.xlu0 %635
      %637 = vrot.lane.b32.xlu0 %v386, 8
      %v638 = vpop.permute.xlu0 %637
      %639 = vrot.lane.b32.xlu0 %v396, 8
      %v640 = vpop.permute.xlu0 %639
      %641 = vrot.lane.b32.xlu0 %v410, 8
      %v642 = vpop.permute.xlu0 %641
      %643 = vrot.lane.b32.xlu0 %v420, 8
      %v644 = vpop.permute.xlu0 %643
      %645 = vrot.lane.b32.xlu0 %v434, 8
      %v646 = vpop.permute.xlu0 %645
      %647 = vrot.lane.b32.xlu0 %v444, 8
      %v648 = vpop.permute.xlu0 %647
      %649 = vrot.lane.b32.xlu0 %v458, 8
      %v650 = vpop.permute.xlu0 %649
      %651 = vrot.lane.b32.xlu0 %v468, 8
      %v652 = vpop.permute.xlu0 %651
      %653 = vrot.lane.b32.xlu0 %v482, 8
      %v654 = vpop.permute.xlu0 %653
      %655 = vrot.lane.b32.xlu0 %v492, 8
      %v656 = vpop.permute.xlu0 %655
      %657 = vrot.lane.b32.xlu0 %v506, 8
      %v658 = vpop.permute.xlu0 %657
      %659 = vrot.lane.b32.xlu0 %v516, 8
      %v660 = vpop.permute.xlu0 %659
      %661 = vrot.lane.b32.xlu0 %v530, 8
      %v662 = vpop.permute.xlu0 %661
      %663 = vrot.lane.b32.xlu0 %v540, 8
      %v664 = vpop.permute.xlu0 %663
      %665 = vrot.lane.b32.xlu0 %v554, 8
      %v666 = vpop.permute.xlu0 %665
      %667 = vrot.lane.b32.xlu0 %v564, 8
      %v668 = vpop.permute.xlu0 %667
      %669 = vrot.lane.b32.xlu0 %v578, 8
      %v670 = vpop.permute.xlu0 %669
      %671 = vrot.lane.b32.xlu0 %v588, 8
      %v672 = vpop.permute.xlu0 %671
      %673 = vrot.lane.b32.xlu0 %v602, 8
      %v674 = vpop.permute.xlu0 %673
      %675 = vrot.lane.b32.xlu0 %v612, 8
      %v676 = vpop.permute.xlu0 %675
      %vm709 = vcmask 126016
      %710 = vst.msk [vmem:[#allocation2] sm:$0xf] %vm709, %v614
      %711 = vst.msk [vmem:[#allocation2 + $0x4] sm:$0xf] %vm709, %v616
      %712 = vst.msk [vmem:[#allocation2 + $0x8] sm:$0xf] %vm709, %v618
      %713 = vst.msk [vmem:[#allocation2 + $0xc] sm:$0xf] %vm709, %v620
      %714 = vst.msk [vmem:[#allocation2 + $0x10] sm:$0xf] %vm709, %v622
      %715 = vst.msk [vmem:[#allocation2 + $0x14] sm:$0xf] %vm709, %v624
      %716 = vst.msk [vmem:[#allocation2 + $0x18] sm:$0xf] %vm709, %v626
      %717 = vst.msk [vmem:[#allocation2 + $0x1c] sm:$0xf] %vm709, %v628
      %718 = vst.msk [vmem:[#allocation2 + $0x20] sm:$0xf] %vm709, %v630
      %719 = vst.msk [vmem:[#allocation2 + $0x24] sm:$0xf] %vm709, %v632
      %720 = vst.msk [vmem:[#allocation2 + $0x28] sm:$0xf] %vm709, %v634
      %721 = vst.msk [vmem:[#allocation2 + $0x2c] sm:$0xf] %vm709, %v636
      %722 = vst.msk [vmem:[#allocation2 + $0x30] sm:$0xf] %vm709, %v638
      %723 = vst.msk [vmem:[#allocation2 + $0x34] sm:$0xf] %vm709, %v640
      %724 = vst.msk [vmem:[#allocation2 + $0x38] sm:$0xf] %vm709, %v642
      %725 = vst.msk [vmem:[#allocation2 + $0x3c] sm:$0xf] %vm709, %v644
      %726 = vst.msk [vmem:[#allocation2 + $0x40] sm:$0xf] %vm709, %v646
      %727 = vst.msk [vmem:[#allocation2 + $0x44] sm:$0xf] %vm709, %v648
      %728 = vst.msk [vmem:[#allocation2 + $0x48] sm:$0xf] %vm709, %v650
      %729 = vst.msk [vmem:[#allocation2 + $0x4c] sm:$0xf] %vm709, %v652
      %730 = vst.msk [vmem:[#allocation2 + $0x50] sm:$0xf] %vm709, %v654
      %731 = vst.msk [vmem:[#allocation2 + $0x54] sm:$0xf] %vm709, %v656
      %732 = vst.msk [vmem:[#allocation2 + $0x58] sm:$0xf] %vm709, %v658
      %733 = vst.msk [vmem:[#allocation2 + $0x5c] sm:$0xf] %vm709, %v660
      %734 = vst.msk [vmem:[#allocation2 + $0x60] sm:$0xf] %vm709, %v662
      %735 = vst.msk [vmem:[#allocation2 + $0x64] sm:$0xf] %vm709, %v664
      %736 = vst.msk [vmem:[#allocation2 + $0x68] sm:$0xf] %vm709, %v666
      %737 = vst.msk [vmem:[#allocation2 + $0x6c] sm:$0xf] %vm709, %v668
      %738 = vst.msk [vmem:[#allocation2 + $0x70] sm:$0xf] %vm709, %v670
      %739 = vst.msk [vmem:[#allocation2 + $0x74] sm:$0xf] %vm709, %v672
      %740 = vst.msk [vmem:[#allocation2 + $0x78] sm:$0xf] %vm709, %v674
      %741 = vst.msk [vmem:[#allocation2 + $0x7c] sm:$0xf] %vm709, %v676
      %vm790 = vcmask 1042432
      %vm791 = vcmask 1046532
      %vm792 = vmor %vm790, %vm791
      %v793 = vrot.slane %v145, 5
      %v794 = vrot.slane %v793, 4
      %v795 = vrot.slane %v146, 5
      %v796 = vsel %vm792, %v794, %v795
      %v797 = vrot.slane %v795, 4
      %v798 = vrot.slane %v147, 5
      %v799 = vsel %vm792, %v797, %v798
      %v800 = vrot.slane %v148, 5
      %v801 = vrot.slane %v800, 4
      %v802 = vrot.slane %v149, 5
      %v803 = vsel %vm792, %v801, %v802
      %v804 = vrot.slane %v802, 4
      %v805 = vrot.slane %v150, 5
      %v806 = vsel %vm792, %v804, %v805
      %v807 = vrot.slane %v151, 5
      %v808 = vrot.slane %v807, 4
      %v809 = vrot.slane %v152, 5
      %v810 = vsel %vm792, %v808, %v809
      %v811 = vrot.slane %v809, 4
      %v812 = vrot.slane %v153, 5
      %v813 = vsel %vm792, %v811, %v812
      %v814 = vrot.slane %v154, 5
      %v815 = vrot.slane %v814, 4
      %v816 = vrot.slane %v155, 5
      %v817 = vsel %vm792, %v815, %v816
      %v818 = vrot.slane %v816, 4
      %v819 = vrot.slane %v156, 5
      %v820 = vsel %vm792, %v818, %v819
      %v821 = vrot.slane %v157, 5
      %v822 = vrot.slane %v821, 4
      %v823 = vrot.slane %v158, 5
      %v824 = vsel %vm792, %v822, %v823
      %v825 = vrot.slane %v823, 4
      %v826 = vrot.slane %v159, 5
      %v827 = vsel %vm792, %v825, %v826
      %v828 = vrot.slane %v160, 5
      %v829 = vrot.slane %v828, 4
      %v830 = vrot.slane %v161, 5
      %v831 = vsel %vm792, %v829, %v830
      %v832 = vrot.slane %v830, 4
      %v833 = vrot.slane %v162, 5
      %v834 = vsel %vm792, %v832, %v833
      %v835 = vrot.slane %v163, 5
      %v836 = vrot.slane %v835, 4
      %v837 = vrot.slane %v164, 5
      %v838 = vsel %vm792, %v836, %v837
      %v839 = vrot.slane %v837, 4
      %v840 = vrot.slane %v165, 5
      %v841 = vsel %vm792, %v839, %v840
      %v842 = vrot.slane %v166, 5
      %v843 = vrot.slane %v842, 4
      %v844 = vrot.slane %v167, 5
      %v845 = vsel %vm792, %v843, %v844
      %v846 = vrot.slane %v844, 4
      %v847 = vrot.slane %v168, 5
      %v848 = vsel %vm792, %v846, %v847
      %v849 = vrot.slane %v169, 5
      %v850 = vrot.slane %v849, 4
      %v851 = vrot.slane %v170, 5
      %v852 = vsel %vm792, %v850, %v851
      %v853 = vrot.slane %v851, 4
      %v854 = vrot.slane %v171, 5
      %v855 = vsel %vm792, %v853, %v854
      %v856 = vrot.slane %v172, 5
      %v857 = vrot.slane %v856, 4
      %v858 = vrot.slane %v173, 5
      %v859 = vsel %vm792, %v857, %v858
      %v860 = vrot.slane %v858, 4
      %v861 = vrot.slane %v174, 5
      %v862 = vsel %vm792, %v860, %v861
      %v863 = vrot.slane %v175, 5
      %v864 = vrot.slane %v863, 4
      %v865 = vrot.slane %v176, 5
      %v866 = vsel %vm792, %v864, %v865
      %v867 = vrot.slane %v865, 4
      %v868 = vrot.slane %v177, 5
      %v869 = vsel %vm792, %v867, %v868
      %v870 = vrot.slane %v178, 5
      %v871 = vrot.slane %v870, 4
      %v872 = vrot.slane %v179, 5
      %v873 = vsel %vm792, %v871, %v872
      %v874 = vrot.slane %v872, 4
      %v875 = vrot.slane %v180, 5
      %v876 = vsel %vm792, %v874, %v875
      %v877 = vrot.slane %v181, 5
      %v878 = vrot.slane %v877, 4
      %v879 = vrot.slane %v182, 5
      %v880 = vsel %vm792, %v878, %v879
      %v881 = vrot.slane %v879, 4
      %v882 = vrot.slane %v183, 5
      %v883 = vsel %vm792, %v881, %v882
      %v884 = vrot.slane %v184, 5
      %v885 = vrot.slane %v884, 4
      %v886 = vrot.slane %v185, 5
      %v887 = vsel %vm792, %v885, %v886
      %v888 = vrot.slane %v886, 4
      %v889 = vrot.slane %v186, 5
      %v890 = vsel %vm792, %v888, %v889
      %v891 = vrot.slane %v187, 5
      %v892 = vrot.slane %v891, 4
      %v893 = vrot.slane %v188, 5
      %v894 = vsel %vm792, %v892, %v893
      %v895 = vrot.slane %v893, 4
      %v896 = vrot.slane %v189, 5
      %v897 = vsel %vm792, %v895, %v896
      %v898 = vrot.slane %v190, 5
      %v899 = vrot.slane %v898, 4
      %v900 = vrot.slane %v191, 5
      %v901 = vsel %vm792, %v899, %v900
      %v902 = vrot.slane %v900, 4
      %v903 = vrot.slane %v192, 5
      %v904 = vsel %vm792, %v902, %v903
      %905 = vrot.lane.b32.xlu0 %v796, 16
      %v906 = vpop.permute.xlu0 %905
      %907 = vrot.lane.b32.xlu0 %v799, 16
      %v908 = vpop.permute.xlu0 %907
      %909 = vrot.lane.b32.xlu0 %v803, 16
      %v910 = vpop.permute.xlu0 %909
      %911 = vrot.lane.b32.xlu0 %v806, 16
      %v912 = vpop.permute.xlu0 %911
      %913 = vrot.lane.b32.xlu0 %v810, 16
      %v914 = vpop.permute.xlu0 %913
      %915 = vrot.lane.b32.xlu0 %v813, 16
      %v916 = vpop.permute.xlu0 %915
      %917 = vrot.lane.b32.xlu0 %v817, 16
      %v918 = vpop.permute.xlu0 %917
      %919 = vrot.lane.b32.xlu0 %v820, 16
      %v920 = vpop.permute.xlu0 %919
      %921 = vrot.lane.b32.xlu0 %v824, 16
      %v922 = vpop.permute.xlu0 %921
      %923 = vrot.lane.b32.xlu0 %v827, 16
      %v924 = vpop.permute.xlu0 %923
      %925 = vrot.lane.b32.xlu0 %v831, 16
      %v926 = vpop.permute.xlu0 %925
      %927 = vrot.lane.b32.xlu0 %v834, 16
      %v928 = vpop.permute.xlu0 %927
      %929 = vrot.lane.b32.xlu0 %v838, 16
      %v930 = vpop.permute.xlu0 %929
      %931 = vrot.lane.b32.xlu0 %v841, 16
      %v932 = vpop.permute.xlu0 %931
      %933 = vrot.lane.b32.xlu0 %v845, 16
      %v934 = vpop.permute.xlu0 %933
      %935 = vrot.lane.b32.xlu0 %v848, 16
      %v936 = vpop.permute.xlu0 %935
      %937 = vrot.lane.b32.xlu0 %v852, 16
      %v938 = vpop.permute.xlu0 %937
      %939 = vrot.lane.b32.xlu0 %v855, 16
      %v940 = vpop.permute.xlu0 %939
      %941 = vrot.lane.b32.xlu0 %v859, 16
      %v942 = vpop.permute.xlu0 %941
      %943 = vrot.lane.b32.xlu0 %v862, 16
      %v944 = vpop.permute.xlu0 %943
      %945 = vrot.lane.b32.xlu0 %v866, 16
      %v946 = vpop.permute.xlu0 %945
      %947 = vrot.lane.b32.xlu0 %v869, 16
      %v948 = vpop.permute.xlu0 %947
      %949 = vrot.lane.b32.xlu0 %v873, 16
      %v950 = vpop.permute.xlu0 %949
      %951 = vrot.lane.b32.xlu0 %v876, 16
      %v952 = vpop.permute.xlu0 %951
      %953 = vrot.lane.b32.xlu0 %v880, 16
      %v954 = vpop.permute.xlu0 %953
      %955 = vrot.lane.b32.xlu0 %v883, 16
      %v956 = vpop.permute.xlu0 %955
      %957 = vrot.lane.b32.xlu0 %v887, 16
      %v958 = vpop.permute.xlu0 %957
      %959 = vrot.lane.b32.xlu0 %v890, 16
      %v960 = vpop.permute.xlu0 %959
      %961 = vrot.lane.b32.xlu0 %v894, 16
      %v962 = vpop.permute.xlu0 %961
      %963 = vrot.lane.b32.xlu0 %v897, 16
      %v964 = vpop.permute.xlu0 %963
      %965 = vrot.lane.b32.xlu0 %v901, 16
      %v966 = vpop.permute.xlu0 %965
      %967 = vrot.lane.b32.xlu0 %v904, 16
      %v968 = vpop.permute.xlu0 %967
      %vm1001 = vcmask 191616
      %1002 = vst.msk [vmem:[#allocation2] sm:$0xf] %vm1001, %v906
      %1003 = vst.msk [vmem:[#allocation2 + $0x4] sm:$0xf] %vm1001, %v908
      %1004 = vst.msk [vmem:[#allocation2 + $0x8] sm:$0xf] %vm1001, %v910
      %1005 = vst.msk [vmem:[#allocation2 + $0xc] sm:$0xf] %vm1001, %v912
      %1006 = vst.msk [vmem:[#allocation2 + $0x10] sm:$0xf] %vm1001, %v914
      %1007 = vst.msk [vmem:[#allocation2 + $0x14] sm:$0xf] %vm1001, %v916
      %1008 = vst.msk [vmem:[#allocation2 + $0x18] sm:$0xf] %vm1001, %v918
      %1009 = vst.msk [vmem:[#allocation2 + $0x1c] sm:$0xf] %vm1001, %v920
      %1010 = vst.msk [vmem:[#allocation2 + $0x20] sm:$0xf] %vm1001, %v922
      %1011 = vst.msk [vmem:[#allocation2 + $0x24] sm:$0xf] %vm1001, %v924
      %1012 = vst.msk [vmem:[#allocation2 + $0x28] sm:$0xf] %vm1001, %v926
      %1013 = vst.msk [vmem:[#allocation2 + $0x2c] sm:$0xf] %vm1001, %v928
      %1014 = vst.msk [vmem:[#allocation2 + $0x30] sm:$0xf] %vm1001, %v930
      %1015 = vst.msk [vmem:[#allocation2 + $0x34] sm:$0xf] %vm1001, %v932
      %1016 = vst.msk [vmem:[#allocation2 + $0x38] sm:$0xf] %vm1001, %v934
      %1017 = vst.msk [vmem:[#allocation2 + $0x3c] sm:$0xf] %vm1001, %v936
      %1018 = vst.msk [vmem:[#allocation2 + $0x40] sm:$0xf] %vm1001, %v938
      %1019 = vst.msk [vmem:[#allocation2 + $0x44] sm:$0xf] %vm1001, %v940
      %1020 = vst.msk [vmem:[#allocation2 + $0x48] sm:$0xf] %vm1001, %v942
      %1021 = vst.msk [vmem:[#allocation2 + $0x4c] sm:$0xf] %vm1001, %v944
      %1022 = vst.msk [vmem:[#allocation2 + $0x50] sm:$0xf] %vm1001, %v946
      %1023 = vst.msk [vmem:[#allocation2 + $0x54] sm:$0xf] %vm1001, %v948
      %1024 = vst.msk [vmem:[#allocation2 + $0x58] sm:$0xf] %vm1001, %v950
      %1025 = vst.msk [vmem:[#allocation2 + $0x5c] sm:$0xf] %vm1001, %v952
      %1026 = vst.msk [vmem:[#allocation2 + $0x60] sm:$0xf] %vm1001, %v954
      %1027 = vst.msk [vmem:[#allocation2 + $0x64] sm:$0xf] %vm1001, %v956
      %1028 = vst.msk [vmem:[#allocation2 + $0x68] sm:$0xf] %vm1001, %v958
      %1029 = vst.msk [vmem:[#allocation2 + $0x6c] sm:$0xf] %vm1001, %v960
      %1030 = vst.msk [vmem:[#allocation2 + $0x70] sm:$0xf] %vm1001, %v962
      %1031 = vst.msk [vmem:[#allocation2 + $0x74] sm:$0xf] %vm1001, %v964
      %1032 = vst.msk [vmem:[#allocation2 + $0x78] sm:$0xf] %vm1001, %v966
      %1033 = vst.msk [vmem:[#allocation2 + $0x7c] sm:$0xf] %vm1001, %v968
      %s1034 = scalar_lea.vmem %s138, 12
      %v1035 = vld [vmem:[%s1034] sm:$0xf]
      %v1036 = vld [vmem:[%s1034 + $0x4] sm:$0xf]
      %v1037 = vld [vmem:[%s1034 + $0x8] sm:$0x1]
      %v1038 = vld [vmem:[%s1034 + $0xc] sm:$0xf]
      %v1039 = vld [vmem:[%s1034 + $0x10] sm:$0xf]
      %v1040 = vld [vmem:[%s1034 + $0x14] sm:$0x1]
      %v1041 = vld [vmem:[%s1034 + $0x18] sm:$0xf]
      %v1042 = vld [vmem:[%s1034 + $0x1c] sm:$0xf]
      %v1043 = vld [vmem:[%s1034 + $0x20] sm:$0x1]
      %v1044 = vld [vmem:[%s1034 + $0x24] sm:$0xf]
      %v1045 = vld [vmem:[%s1034 + $0x28] sm:$0xf]
      %v1046 = vld [vmem:[%s1034 + $0x2c] sm:$0x1]
      %v1047 = vld [vmem:[%s1034 + $0x30] sm:$0xf]
      %v1048 = vld [vmem:[%s1034 + $0x34] sm:$0xf]
      %v1049 = vld [vmem:[%s1034 + $0x38] sm:$0x1]
      %v1050 = vld [vmem:[%s1034 + $0x3c] sm:$0xf]
      %v1051 = vld [vmem:[%s1034 + $0x40] sm:$0xf]
      %v1052 = vld [vmem:[%s1034 + $0x44] sm:$0x1]
      %v1053 = vld [vmem:[%s1034 + $0x48] sm:$0xf]
      %v1054 = vld [vmem:[%s1034 + $0x4c] sm:$0xf]
      %v1055 = vld [vmem:[%s1034 + $0x50] sm:$0x1]
      %v1056 = vld [vmem:[%s1034 + $0x54] sm:$0xf]
      %v1057 = vld [vmem:[%s1034 + $0x58] sm:$0xf]
      %v1058 = vld [vmem:[%s1034 + $0x5c] sm:$0x1]
      %v1059 = vld [vmem:[%s1034 + $0x60] sm:$0xf]
      %v1060 = vld [vmem:[%s1034 + $0x64] sm:$0xf]
      %v1061 = vld [vmem:[%s1034 + $0x68] sm:$0x1]
      %v1062 = vld [vmem:[%s1034 + $0x6c] sm:$0xf]
      %v1063 = vld [vmem:[%s1034 + $0x70] sm:$0xf]
      %v1064 = vld [vmem:[%s1034 + $0x74] sm:$0x1]
      %v1065 = vld [vmem:[%s1034 + $0x78] sm:$0xf]
      %v1066 = vld [vmem:[%s1034 + $0x7c] sm:$0xf]
      %v1067 = vld [vmem:[%s1034 + $0x80] sm:$0x1]
      %v1068 = vld [vmem:[%s1034 + $0x84] sm:$0xf]
      %v1069 = vld [vmem:[%s1034 + $0x88] sm:$0xf]
      %v1070 = vld [vmem:[%s1034 + $0x8c] sm:$0x1]
      %v1071 = vld [vmem:[%s1034 + $0x90] sm:$0xf]
      %v1072 = vld [vmem:[%s1034 + $0x94] sm:$0xf]
      %v1073 = vld [vmem:[%s1034 + $0x98] sm:$0x1]
      %v1074 = vld [vmem:[%s1034 + $0x9c] sm:$0xf]
      %v1075 = vld [vmem:[%s1034 + $0xa0] sm:$0xf]
      %v1076 = vld [vmem:[%s1034 + $0xa4] sm:$0x1]
      %v1077 = vld [vmem:[%s1034 + $0xa8] sm:$0xf]
      %v1078 = vld [vmem:[%s1034 + $0xac] sm:$0xf]
      %v1079 = vld [vmem:[%s1034 + $0xb0] sm:$0x1]
      %v1080 = vld [vmem:[%s1034 + $0xb4] sm:$0xf]
      %v1081 = vld [vmem:[%s1034 + $0xb8] sm:$0xf]
      %v1082 = vld [vmem:[%s1034 + $0xbc] sm:$0x1]
      %1115 = vrot.lane.b32.xlu0 %v1035, 24
      %v1116 = vpop.permute.xlu0 %1115
      %1117 = vrot.lane.b32.xlu0 %v1036, 24
      %v1118 = vpop.permute.xlu0 %1117
      %1119 = vrot.lane.b32.xlu0 %v1038, 24
      %v1120 = vpop.permute.xlu0 %1119
      %1121 = vrot.lane.b32.xlu0 %v1039, 24
      %v1122 = vpop.permute.xlu0 %1121
      %1123 = vrot.lane.b32.xlu0 %v1041, 24
      %v1124 = vpop.permute.xlu0 %1123
      %1125 = vrot.lane.b32.xlu0 %v1042, 24
      %v1126 = vpop.permute.xlu0 %1125
      %1127 = vrot.lane.b32.xlu0 %v1044, 24
      %v1128 = vpop.permute.xlu0 %1127
      %1129 = vrot.lane.b32.xlu0 %v1045, 24
      %v1130 = vpop.permute.xlu0 %1129
      %1131 = vrot.lane.b32.xlu0 %v1047, 24
      %v1132 = vpop.permute.xlu0 %1131
      %1133 = vrot.lane.b32.xlu0 %v1048, 24
      %v1134 = vpop.permute.xlu0 %1133
      %1135 = vrot.lane.b32.xlu0 %v1050, 24
      %v1136 = vpop.permute.xlu0 %1135
      %1137 = vrot.lane.b32.xlu0 %v1051, 24
      %v1138 = vpop.permute.xlu0 %1137
      %1139 = vrot.lane.b32.xlu0 %v1053, 24
      %v1140 = vpop.permute.xlu0 %1139
      %1141 = vrot.lane.b32.xlu0 %v1054, 24
      %v1142 = vpop.permute.xlu0 %1141
      %1143 = vrot.lane.b32.xlu0 %v1056, 24
      %v1144 = vpop.permute.xlu0 %1143
      %1145 = vrot.lane.b32.xlu0 %v1057, 24
      %v1146 = vpop.permute.xlu0 %1145
      %1147 = vrot.lane.b32.xlu0 %v1059, 24
      %v1148 = vpop.permute.xlu0 %1147
      %1149 = vrot.lane.b32.xlu0 %v1060, 24
      %v1150 = vpop.permute.xlu0 %1149
      %1151 = vrot.lane.b32.xlu0 %v1062, 24
      %v1152 = vpop.permute.xlu0 %1151
      %1153 = vrot.lane.b32.xlu0 %v1063, 24
      %v1154 = vpop.permute.xlu0 %1153
      %1155 = vrot.lane.b32.xlu0 %v1065, 24
      %v1156 = vpop.permute.xlu0 %1155
      %1157 = vrot.lane.b32.xlu0 %v1066, 24
      %v1158 = vpop.permute.xlu0 %1157
      %1159 = vrot.lane.b32.xlu0 %v1068, 24
      %v1160 = vpop.permute.xlu0 %1159
      %1161 = vrot.lane.b32.xlu0 %v1069, 24
      %v1162 = vpop.permute.xlu0 %1161
      %1163 = vrot.lane.b32.xlu0 %v1071, 24
      %v1164 = vpop.permute.xlu0 %1163
      %1165 = vrot.lane.b32.xlu0 %v1072, 24
      %v1166 = vpop.permute.xlu0 %1165
      %1167 = vrot.lane.b32.xlu0 %v1074, 24
      %v1168 = vpop.permute.xlu0 %1167
      %1169 = vrot.lane.b32.xlu0 %v1075, 24
      %v1170 = vpop.permute.xlu0 %1169
      %1171 = vrot.lane.b32.xlu0 %v1077, 24
      %v1172 = vpop.permute.xlu0 %1171
      %1173 = vrot.lane.b32.xlu0 %v1078, 24
      %v1174 = vpop.permute.xlu0 %1173
      %1175 = vrot.lane.b32.xlu0 %v1080, 24
      %v1176 = vpop.permute.xlu0 %1175
      %1177 = vrot.lane.b32.xlu0 %v1081, 24
      %v1178 = vpop.permute.xlu0 %1177
      %vm1211 = vcmask 257216
      %1212 = vst.msk [vmem:[#allocation2] sm:$0xf] %vm1211, %v1116
      %1213 = vst.msk [vmem:[#allocation2 + $0x4] sm:$0xf] %vm1211, %v1118
      %1214 = vst.msk [vmem:[#allocation2 + $0x8] sm:$0xf] %vm1211, %v1120
      %1215 = vst.msk [vmem:[#allocation2 + $0xc] sm:$0xf] %vm1211, %v1122
      %1216 = vst.msk [vmem:[#allocation2 + $0x10] sm:$0xf] %vm1211, %v1124
      %1217 = vst.msk [vmem:[#allocation2 + $0x14] sm:$0xf] %vm1211, %v1126
      %1218 = vst.msk [vmem:[#allocation2 + $0x18] sm:$0xf] %vm1211, %v1128
      %1219 = vst.msk [vmem:[#allocation2 + $0x1c] sm:$0xf] %vm1211, %v1130
      %1220 = vst.msk [vmem:[#allocation2 + $0x20] sm:$0xf] %vm1211, %v1132
      %1221 = vst.msk [vmem:[#allocation2 + $0x24] sm:$0xf] %vm1211, %v1134
      %1222 = vst.msk [vmem:[#allocation2 + $0x28] sm:$0xf] %vm1211, %v1136
      %1223 = vst.msk [vmem:[#allocation2 + $0x2c] sm:$0xf] %vm1211, %v1138
      %1224 = vst.msk [vmem:[#allocation2 + $0x30] sm:$0xf] %vm1211, %v1140
      %1225 = vst.msk [vmem:[#allocation2 + $0x34] sm:$0xf] %vm1211, %v1142
      %1226 = vst.msk [vmem:[#allocation2 + $0x38] sm:$0xf] %vm1211, %v1144
      %1227 = vst.msk [vmem:[#allocation2 + $0x3c] sm:$0xf] %vm1211, %v1146
      %1228 = vst.msk [vmem:[#allocation2 + $0x40] sm:$0xf] %vm1211, %v1148
      %1229 = vst.msk [vmem:[#allocation2 + $0x44] sm:$0xf] %vm1211, %v1150
      %1230 = vst.msk [vmem:[#allocation2 + $0x48] sm:$0xf] %vm1211, %v1152
      %1231 = vst.msk [vmem:[#allocation2 + $0x4c] sm:$0xf] %vm1211, %v1154
      %1232 = vst.msk [vmem:[#allocation2 + $0x50] sm:$0xf] %vm1211, %v1156
      %1233 = vst.msk [vmem:[#allocation2 + $0x54] sm:$0xf] %vm1211, %v1158
      %1234 = vst.msk [vmem:[#allocation2 + $0x58] sm:$0xf] %vm1211, %v1160
      %1235 = vst.msk [vmem:[#allocation2 + $0x5c] sm:$0xf] %vm1211, %v1162
      %1236 = vst.msk [vmem:[#allocation2 + $0x60] sm:$0xf] %vm1211, %v1164
      %1237 = vst.msk [vmem:[#allocation2 + $0x64] sm:$0xf] %vm1211, %v1166
      %1238 = vst.msk [vmem:[#allocation2 + $0x68] sm:$0xf] %vm1211, %v1168
      %1239 = vst.msk [vmem:[#allocation2 + $0x6c] sm:$0xf] %vm1211, %v1170
      %1240 = vst.msk [vmem:[#allocation2 + $0x70] sm:$0xf] %vm1211, %v1172
      %1241 = vst.msk [vmem:[#allocation2 + $0x74] sm:$0xf] %vm1211, %v1174
      %1242 = vst.msk [vmem:[#allocation2 + $0x78] sm:$0xf] %vm1211, %v1176
      %1243 = vst.msk [vmem:[#allocation2 + $0x7c] sm:$0xf] %vm1211, %v1178
      %v1245 = vshrl.u32 %v1035, 16
      %v1247 = vrot.slane %v1245, 4
      %v1248 = vshll.u32 %v1035, 16
      %v1250 = vrot.slane %v1248, 5
      %v1251 = vor.u32 %v1247, %v1250
      %v1252 = vrot.slane %v1251, 4
      %v1254 = vshll.u32 %v1036, 16
      %v1256 = vrot.slane %v1254, 5
      %v1257 = vsel %vm228, %v1252, %v1256
      %v1258 = vshrl.u32 %v1036, 16
      %v1260 = vrot.slane %v1258, 4
      %v1261 = vor.u32 %v1260, %v1256
      %v1262 = vrot.slane %v1261, 4
      %v1264 = vshll.u32 %v1037, 16
      %v1266 = vrot.slane %v1264, 5
      %v1267 = vsel %vm228, %v1262, %v1266
      %v1269 = vshrl.u32 %v1038, 16
      %v1271 = vrot.slane %v1269, 4
      %v1272 = vshll.u32 %v1038, 16
      %v1274 = vrot.slane %v1272, 5
      %v1275 = vor.u32 %v1271, %v1274
      %v1276 = vrot.slane %v1275, 4
      %v1278 = vshll.u32 %v1039, 16
      %v1280 = vrot.slane %v1278, 5
      %v1281 = vsel %vm228, %v1276, %v1280
      %v1282 = vshrl.u32 %v1039, 16
      %v1284 = vrot.slane %v1282, 4
      %v1285 = vor.u32 %v1284, %v1280
      %v1286 = vrot.slane %v1285, 4
      %v1288 = vshll.u32 %v1040, 16
      %v1290 = vrot.slane %v1288, 5
      %v1291 = vsel %vm228, %v1286, %v1290
      %v1293 = vshrl.u32 %v1041, 16
      %v1295 = vrot.slane %v1293, 4
      %v1296 = vshll.u32 %v1041, 16
      %v1298 = vrot.slane %v1296, 5
      %v1299 = vor.u32 %v1295, %v1298
      %v1300 = vrot.slane %v1299, 4
      %v1302 = vshll.u32 %v1042, 16
      %v1304 = vrot.slane %v1302, 5
      %v1305 = vsel %vm228, %v1300, %v1304
      %v1306 = vshrl.u32 %v1042, 16
      %v1308 = vrot.slane %v1306, 4
      %v1309 = vor.u32 %v1308, %v1304
      %v1310 = vrot.slane %v1309, 4
      %v1312 = vshll.u32 %v1043, 16
      %v1314 = vrot.slane %v1312, 5
      %v1315 = vsel %vm228, %v1310, %v1314
      %v1317 = vshrl.u32 %v1044, 16
      %v1319 = vrot.slane %v1317, 4
      %v1320 = vshll.u32 %v1044, 16
      %v1322 = vrot.slane %v1320, 5
      %v1323 = vor.u32 %v1319, %v1322
      %v1324 = vrot.slane %v1323, 4
      %v1326 = vshll.u32 %v1045, 16
      %v1328 = vrot.slane %v1326, 5
      %v1329 = vsel %vm228, %v1324, %v1328
      %v1330 = vshrl.u32 %v1045, 16
      %v1332 = vrot.slane %v1330, 4
      %v1333 = vor.u32 %v1332, %v1328
      %v1334 = vrot.slane %v1333, 4
      %v1336 = vshll.u32 %v1046, 16
      %v1338 = vrot.slane %v1336, 5
      %v1339 = vsel %vm228, %v1334, %v1338
      %v1341 = vshrl.u32 %v1047, 16
      %v1343 = vrot.slane %v1341, 4
      %v1344 = vshll.u32 %v1047, 16
      %v1346 = vrot.slane %v1344, 5
      %v1347 = vor.u32 %v1343, %v1346
      %v1348 = vrot.slane %v1347, 4
      %v1350 = vshll.u32 %v1048, 16
      %v1352 = vrot.slane %v1350, 5
      %v1353 = vsel %vm228, %v1348, %v1352
      %v1354 = vshrl.u32 %v1048, 16
      %v1356 = vrot.slane %v1354, 4
      %v1357 = vor.u32 %v1356, %v1352
      %v1358 = vrot.slane %v1357, 4
      %v1360 = vshll.u32 %v1049, 16
      %v1362 = vrot.slane %v1360, 5
      %v1363 = vsel %vm228, %v1358, %v1362
      %v1365 = vshrl.u32 %v1050, 16
      %v1367 = vrot.slane %v1365, 4
      %v1368 = vshll.u32 %v1050, 16
      %v1370 = vrot.slane %v1368, 5
      %v1371 = vor.u32 %v1367, %v1370
      %v1372 = vrot.slane %v1371, 4
      %v1374 = vshll.u32 %v1051, 16
      %v1376 = vrot.slane %v1374, 5
      %v1377 = vsel %vm228, %v1372, %v1376
      %v1378 = vshrl.u32 %v1051, 16
      %v1380 = vrot.slane %v1378, 4
      %v1381 = vor.u32 %v1380, %v1376
      %v1382 = vrot.slane %v1381, 4
      %v1384 = vshll.u32 %v1052, 16
      %v1386 = vrot.slane %v1384, 5
      %v1387 = vsel %vm228, %v1382, %v1386
      %v1389 = vshrl.u32 %v1053, 16
      %v1391 = vrot.slane %v1389, 4
      %v1392 = vshll.u32 %v1053, 16
      %v1394 = vrot.slane %v1392, 5
      %v1395 = vor.u32 %v1391, %v1394
      %v1396 = vrot.slane %v1395, 4
      %v1398 = vshll.u32 %v1054, 16
      %v1400 = vrot.slane %v1398, 5
      %v1401 = vsel %vm228, %v1396, %v1400
      %v1402 = vshrl.u32 %v1054, 16
      %v1404 = vrot.slane %v1402, 4
      %v1405 = vor.u32 %v1404, %v1400
      %v1406 = vrot.slane %v1405, 4
      %v1408 = vshll.u32 %v1055, 16
      %v1410 = vrot.slane %v1408, 5
      %v1411 = vsel %vm228, %v1406, %v1410
      %v1413 = vshrl.u32 %v1056, 16
      %v1415 = vrot.slane %v1413, 4
      %v1416 = vshll.u32 %v1056, 16
      %v1418 = vrot.slane %v1416, 5
      %v1419 = vor.u32 %v1415, %v1418
      %v1420 = vrot.slane %v1419, 4
      %v1422 = vshll.u32 %v1057, 16
      %v1424 = vrot.slane %v1422, 5
      %v1425 = vsel %vm228, %v1420, %v1424
      %v1426 = vshrl.u32 %v1057, 16
      %v1428 = vrot.slane %v1426, 4
      %v1429 = vor.u32 %v1428, %v1424
      %v1430 = vrot.slane %v1429, 4
      %v1432 = vshll.u32 %v1058, 16
      %v1434 = vrot.slane %v1432, 5
      %v1435 = vsel %vm228, %v1430, %v1434
      %v1437 = vshrl.u32 %v1059, 16
      %v1439 = vrot.slane %v1437, 4
      %v1440 = vshll.u32 %v1059, 16
      %v1442 = vrot.slane %v1440, 5
      %v1443 = vor.u32 %v1439, %v1442
      %v1444 = vrot.slane %v1443, 4
      %v1446 = vshll.u32 %v1060, 16
      %v1448 = vrot.slane %v1446, 5
      %v1449 = vsel %vm228, %v1444, %v1448
      %v1450 = vshrl.u32 %v1060, 16
      %v1452 = vrot.slane %v1450, 4
      %v1453 = vor.u32 %v1452, %v1448
      %v1454 = vrot.slane %v1453, 4
      %v1456 = vshll.u32 %v1061, 16
      %v1458 = vrot.slane %v1456, 5
      %v1459 = vsel %vm228, %v1454, %v1458
      %v1461 = vshrl.u32 %v1062, 16
      %v1463 = vrot.slane %v1461, 4
      %v1464 = vshll.u32 %v1062, 16
      %v1466 = vrot.slane %v1464, 5
      %v1467 = vor.u32 %v1463, %v1466
      %v1468 = vrot.slane %v1467, 4
      %v1470 = vshll.u32 %v1063, 16
      %v1472 = vrot.slane %v1470, 5
      %v1473 = vsel %vm228, %v1468, %v1472
      %v1474 = vshrl.u32 %v1063, 16
      %v1476 = vrot.slane %v1474, 4
      %v1477 = vor.u32 %v1476, %v1472
      %v1478 = vrot.slane %v1477, 4
      %v1480 = vshll.u32 %v1064, 16
      %v1482 = vrot.slane %v1480, 5
      %v1483 = vsel %vm228, %v1478, %v1482
      %v1485 = vshrl.u32 %v1065, 16
      %v1487 = vrot.slane %v1485, 4
      %v1488 = vshll.u32 %v1065, 16
      %v1490 = vrot.slane %v1488, 5
      %v1491 = vor.u32 %v1487, %v1490
      %v1492 = vrot.slane %v1491, 4
      %v1494 = vshll.u32 %v1066, 16
      %v1496 = vrot.slane %v1494, 5
      %v1497 = vsel %vm228, %v1492, %v1496
      %v1498 = vshrl.u32 %v1066, 16
      %v1500 = vrot.slane %v1498, 4
      %v1501 = vor.u32 %v1500, %v1496
      %v1502 = vrot.slane %v1501, 4
      %v1504 = vshll.u32 %v1067, 16
      %v1506 = vrot.slane %v1504, 5
      %v1507 = vsel %vm228, %v1502, %v1506
      %v1509 = vshrl.u32 %v1068, 16
      %v1511 = vrot.slane %v1509, 4
      %v1512 = vshll.u32 %v1068, 16
      %v1514 = vrot.slane %v1512, 5
      %v1515 = vor.u32 %v1511, %v1514
      %v1516 = vrot.slane %v1515, 4
      %v1518 = vshll.u32 %v1069, 16
      %v1520 = vrot.slane %v1518, 5
      %v1521 = vsel %vm228, %v1516, %v1520
      %v1522 = vshrl.u32 %v1069, 16
      %v1524 = vrot.slane %v1522, 4
      %v1525 = vor.u32 %v1524, %v1520
      %v1526 = vrot.slane %v1525, 4
      %v1528 = vshll.u32 %v1070, 16
      %v1530 = vrot.slane %v1528, 5
      %v1531 = vsel %vm228, %v1526, %v1530
      %v1533 = vshrl.u32 %v1071, 16
      %v1535 = vrot.slane %v1533, 4
      %v1536 = vshll.u32 %v1071, 16
      %v1538 = vrot.slane %v1536, 5
      %v1539 = vor.u32 %v1535, %v1538
      %v1540 = vrot.slane %v1539, 4
      %v1542 = vshll.u32 %v1072, 16
      %v1544 = vrot.slane %v1542, 5
      %v1545 = vsel %vm228, %v1540, %v1544
      %v1546 = vshrl.u32 %v1072, 16
      %v1548 = vrot.slane %v1546, 4
      %v1549 = vor.u32 %v1548, %v1544
      %v1550 = vrot.slane %v1549, 4
      %v1552 = vshll.u32 %v1073, 16
      %v1554 = vrot.slane %v1552, 5
      %v1555 = vsel %vm228, %v1550, %v1554
      %v1557 = vshrl.u32 %v1074, 16
      %v1559 = vrot.slane %v1557, 4
      %v1560 = vshll.u32 %v1074, 16
      %v1562 = vrot.slane %v1560, 5
      %v1563 = vor.u32 %v1559, %v1562
      %v1564 = vrot.slane %v1563, 4
      %v1566 = vshll.u32 %v1075, 16
      %v1568 = vrot.slane %v1566, 5
      %v1569 = vsel %vm228, %v1564, %v1568
      %v1570 = vshrl.u32 %v1075, 16
      %v1572 = vrot.slane %v1570, 4
      %v1573 = vor.u32 %v1572, %v1568
      %v1574 = vrot.slane %v1573, 4
      %v1576 = vshll.u32 %v1076, 16
      %v1578 = vrot.slane %v1576, 5
      %v1579 = vsel %vm228, %v1574, %v1578
      %v1581 = vshrl.u32 %v1077, 16
      %v1583 = vrot.slane %v1581, 4
      %v1584 = vshll.u32 %v1077, 16
      %v1586 = vrot.slane %v1584, 5
      %v1587 = vor.u32 %v1583, %v1586
      %v1588 = vrot.slane %v1587, 4
      %v1590 = vshll.u32 %v1078, 16
      %v1592 = vrot.slane %v1590, 5
      %v1593 = vsel %vm228, %v1588, %v1592
      %v1594 = vshrl.u32 %v1078, 16
      %v1596 = vrot.slane %v1594, 4
      %v1597 = vor.u32 %v1596, %v1592
      %v1598 = vrot.slane %v1597, 4
      %v1600 = vshll.u32 %v1079, 16
      %v1602 = vrot.slane %v1600, 5
      %v1603 = vsel %vm228, %v1598, %v1602
      %v1605 = vshrl.u32 %v1080, 16
      %v1607 = vrot.slane %v1605, 4
      %v1608 = vshll.u32 %v1080, 16
      %v1610 = vrot.slane %v1608, 5
      %v1611 = vor.u32 %v1607, %v1610
      %v1612 = vrot.slane %v1611, 4
      %v1614 = vshll.u32 %v1081, 16
      %v1616 = vrot.slane %v1614, 5
      %v1617 = vsel %vm228, %v1612, %v1616
      %v1618 = vshrl.u32 %v1081, 16
      %v1620 = vrot.slane %v1618, 4
      %v1621 = vor.u32 %v1620, %v1616
      %v1622 = vrot.slane %v1621, 4
      %v1624 = vshll.u32 %v1082, 16
      %v1626 = vrot.slane %v1624, 5
      %v1627 = vsel %vm228, %v1622, %v1626
      %1628 = vrot.lane.b32.xlu0 %v1257, 32
      %v1629 = vpop.permute.xlu0 %1628
      %1630 = vrot.lane.b32.xlu0 %v1267, 32
      %v1631 = vpop.permute.xlu0 %1630
      %1632 = vrot.lane.b32.xlu0 %v1281, 32
      %v1633 = vpop.permute.xlu0 %1632
      %1634 = vrot.lane.b32.xlu0 %v1291, 32
      %v1635 = vpop.permute.xlu0 %1634
      %1636 = vrot.lane.b32.xlu0 %v1305, 32
      %v1637 = vpop.permute.xlu0 %1636
      %1638 = vrot.lane.b32.xlu0 %v1315, 32
      %v1639 = vpop.permute.xlu0 %1638
      %1640 = vrot.lane.b32.xlu0 %v1329, 32
      %v1641 = vpop.permute.xlu0 %1640
      %1642 = vrot.lane.b32.xlu0 %v1339, 32
      %v1643 = vpop.permute.xlu0 %1642
      %1644 = vrot.lane.b32.xlu0 %v1353, 32
      %v1645 = vpop.permute.xlu0 %1644
      %1646 = vrot.lane.b32.xlu0 %v1363, 32
      %v1647 = vpop.permute.xlu0 %1646
      %1648 = vrot.lane.b32.xlu0 %v1377, 32
      %v1649 = vpop.permute.xlu0 %1648
      %1650 = vrot.lane.b32.xlu0 %v1387, 32
      %v1651 = vpop.permute.xlu0 %1650
      %1652 = vrot.lane.b32.xlu0 %v1401, 32
      %v1653 = vpop.permute.xlu0 %1652
      %1654 = vrot.lane.b32.xlu0 %v1411, 32
      %v1655 = vpop.permute.xlu0 %1654
      %1656 = vrot.lane.b32.xlu0 %v1425, 32
      %v1657 = vpop.permute.xlu0 %1656
      %1658 = vrot.lane.b32.xlu0 %v1435, 32
      %v1659 = vpop.permute.xlu0 %1658
      %1660 = vrot.lane.b32.xlu0 %v1449, 32
      %v1661 = vpop.permute.xlu0 %1660
      %1662 = vrot.lane.b32.xlu0 %v1459, 32
      %v1663 = vpop.permute.xlu0 %1662
      %1664 = vrot.lane.b32.xlu0 %v1473, 32
      %v1665 = vpop.permute.xlu0 %1664
      %1666 = vrot.lane.b32.xlu0 %v1483, 32
      %v1667 = vpop.permute.xlu0 %1666
      %1668 = vrot.lane.b32.xlu0 %v1497, 32
      %v1669 = vpop.permute.xlu0 %1668
      %1670 = vrot.lane.b32.xlu0 %v1507, 32
      %v1671 = vpop.permute.xlu0 %1670
      %1672 = vrot.lane.b32.xlu0 %v1521, 32
      %v1673 = vpop.permute.xlu0 %1672
      %1674 = vrot.lane.b32.xlu0 %v1531, 32
      %v1675 = vpop.permute.xlu0 %1674
      %1676 = vrot.lane.b32.xlu0 %v1545, 32
      %v1677 = vpop.permute.xlu0 %1676
      %1678 = vrot.lane.b32.xlu0 %v1555, 32
      %v1679 = vpop.permute.xlu0 %1678
      %1680 = vrot.lane.b32.xlu0 %v1569, 32
      %v1681 = vpop.permute.xlu0 %1680
      %1682 = vrot.lane.b32.xlu0 %v1579, 32
      %v1683 = vpop.permute.xlu0 %1682
      %1684 = vrot.lane.b32.xlu0 %v1593, 32
      %v1685 = vpop.permute.xlu0 %1684
      %1686 = vrot.lane.b32.xlu0 %v1603, 32
      %v1687 = vpop.permute.xlu0 %1686
      %1688 = vrot.lane.b32.xlu0 %v1617, 32
      %v1689 = vpop.permute.xlu0 %1688
      %1690 = vrot.lane.b32.xlu0 %v1627, 32
      %v1691 = vpop.permute.xlu0 %1690
      %vm1724 = vcmask 322816
      %1725 = vst.msk [vmem:[#allocation2] sm:$0xf] %vm1724, %v1629
      %1726 = vst.msk [vmem:[#allocation2 + $0x4] sm:$0xf] %vm1724, %v1631
      %1727 = vst.msk [vmem:[#allocation2 + $0x8] sm:$0xf] %vm1724, %v1633
      %1728 = vst.msk [vmem:[#allocation2 + $0xc] sm:$0xf] %vm1724, %v1635
      %1729 = vst.msk [vmem:[#allocation2 + $0x10] sm:$0xf] %vm1724, %v1637
      %1730 = vst.msk [vmem:[#allocation2 + $0x14] sm:$0xf] %vm1724, %v1639
      %1731 = vst.msk [vmem:[#allocation2 + $0x18] sm:$0xf] %vm1724, %v1641
      %1732 = vst.msk [vmem:[#allocation2 + $0x1c] sm:$0xf] %vm1724, %v1643
      %1733 = vst.msk [vmem:[#allocation2 + $0x20] sm:$0xf] %vm1724, %v1645
      %1734 = vst.msk [vmem:[#allocation2 + $0x24] sm:$0xf] %vm1724, %v1647
      %1735 = vst.msk [vmem:[#allocation2 + $0x28] sm:$0xf] %vm1724, %v1649
      %1736 = vst.msk [vmem:[#allocation2 + $0x2c] sm:$0xf] %vm1724, %v1651
      %1737 = vst.msk [vmem:[#allocation2 + $0x30] sm:$0xf] %vm1724, %v1653
      %1738 = vst.msk [vmem:[#allocation2 + $0x34] sm:$0xf] %vm1724, %v1655
      %1739 = vst.msk [vmem:[#allocation2 + $0x38] sm:$0xf] %vm1724, %v1657
      %1740 = vst.msk [vmem:[#allocation2 + $0x3c] sm:$0xf] %vm1724, %v1659
      %1741 = vst.msk [vmem:[#allocation2 + $0x40] sm:$0xf] %vm1724, %v1661
      %1742 = vst.msk [vmem:[#allocation2 + $0x44] sm:$0xf] %vm1724, %v1663
      %1743 = vst.msk [vmem:[#allocation2 + $0x48] sm:$0xf] %vm1724, %v1665
      %1744 = vst.msk [vmem:[#allocation2 + $0x4c] sm:$0xf] %vm1724, %v1667
      %1745 = vst.msk [vmem:[#allocation2 + $0x50] sm:$0xf] %vm1724, %v1669
      %1746 = vst.msk [vmem:[#allocation2 + $0x54] sm:$0xf] %vm1724, %v1671
      %1747 = vst.msk [vmem:[#allocation2 + $0x58] sm:$0xf] %vm1724, %v1673
      %1748 = vst.msk [vmem:[#allocation2 + $0x5c] sm:$0xf] %vm1724, %v1675
      %1749 = vst.msk [vmem:[#allocation2 + $0x60] sm:$0xf] %vm1724, %v1677
      %1750 = vst.msk [vmem:[#allocation2 + $0x64] sm:$0xf] %vm1724, %v1679
      %1751 = vst.msk [vmem:[#allocation2 + $0x68] sm:$0xf] %vm1724, %v1681
      %1752 = vst.msk [vmem:[#allocation2 + $0x6c] sm:$0xf] %vm1724, %v1683
      %1753 = vst.msk [vmem:[#allocation2 + $0x70] sm:$0xf] %vm1724, %v1685
      %1754 = vst.msk [vmem:[#allocation2 + $0x74] sm:$0xf] %vm1724, %v1687
      %1755 = vst.msk [vmem:[#allocation2 + $0x78] sm:$0xf] %vm1724, %v1689
      %1756 = vst.msk [vmem:[#allocation2 + $0x7c] sm:$0xf] %vm1724, %v1691
      %v1773 = vrot.slane %v1035, 5
      %v1774 = vrot.slane %v1773, 4
      %v1775 = vrot.slane %v1036, 5
      %v1776 = vsel %vm792, %v1774, %v1775
      %v1777 = vrot.slane %v1775, 4
      %v1778 = vrot.slane %v1037, 5
      %v1779 = vsel %vm792, %v1777, %v1778
      %v1780 = vrot.slane %v1038, 5
      %v1781 = vrot.slane %v1780, 4
      %v1782 = vrot.slane %v1039, 5
      %v1783 = vsel %vm792, %v1781, %v1782
      %v1784 = vrot.slane %v1782, 4
      %v1785 = vrot.slane %v1040, 5
      %v1786 = vsel %vm792, %v1784, %v1785
      %v1787 = vrot.slane %v1041, 5
      %v1788 = vrot.slane %v1787, 4
      %v1789 = vrot.slane %v1042, 5
      %v1790 = vsel %vm792, %v1788, %v1789
      %v1791 = vrot.slane %v1789, 4
      %v1792 = vrot.slane %v1043, 5
      %v1793 = vsel %vm792, %v1791, %v1792
      %v1794 = vrot.slane %v1044, 5
      %v1795 = vrot.slane %v1794, 4
      %v1796 = vrot.slane %v1045, 5
      %v1797 = vsel %vm792, %v1795, %v1796
      %v1798 = vrot.slane %v1796, 4
      %v1799 = vrot.slane %v1046, 5
      %v1800 = vsel %vm792, %v1798, %v1799
      %v1801 = vrot.slane %v1047, 5
      %v1802 = vrot.slane %v1801, 4
      %v1803 = vrot.slane %v1048, 5
      %v1804 = vsel %vm792, %v1802, %v1803
      %v1805 = vrot.slane %v1803, 4
      %v1806 = vrot.slane %v1049, 5
      %v1807 = vsel %vm792, %v1805, %v1806
      %v1808 = vrot.slane %v1050, 5
      %v1809 = vrot.slane %v1808, 4
      %v1810 = vrot.slane %v1051, 5
      %v1811 = vsel %vm792, %v1809, %v1810
      %v1812 = vrot.slane %v1810, 4
      %v1813 = vrot.slane %v1052, 5
      %v1814 = vsel %vm792, %v1812, %v1813
      %v1815 = vrot.slane %v1053, 5
      %v1816 = vrot.slane %v1815, 4
      %v1817 = vrot.slane %v1054, 5
      %v1818 = vsel %vm792, %v1816, %v1817
      %v1819 = vrot.slane %v1817, 4
      %v1820 = vrot.slane %v1055, 5
      %v1821 = vsel %vm792, %v1819, %v1820
      %v1822 = vrot.slane %v1056, 5
      %v1823 = vrot.slane %v1822, 4
      %v1824 = vrot.slane %v1057, 5
      %v1825 = vsel %vm792, %v1823, %v1824
      %v1826 = vrot.slane %v1824, 4
      %v1827 = vrot.slane %v1058, 5
      %v1828 = vsel %vm792, %v1826, %v1827
      %v1829 = vrot.slane %v1059, 5
      %v1830 = vrot.slane %v1829, 4
      %v1831 = vrot.slane %v1060, 5
      %v1832 = vsel %vm792, %v1830, %v1831
      %v1833 = vrot.slane %v1831, 4
      %v1834 = vrot.slane %v1061, 5
      %v1835 = vsel %vm792, %v1833, %v1834
      %v1836 = vrot.slane %v1062, 5
      %v1837 = vrot.slane %v1836, 4
      %v1838 = vrot.slane %v1063, 5
      %v1839 = vsel %vm792, %v1837, %v1838
      %v1840 = vrot.slane %v1838, 4
      %v1841 = vrot.slane %v1064, 5
      %v1842 = vsel %vm792, %v1840, %v1841
      %v1843 = vrot.slane %v1065, 5
      %v1844 = vrot.slane %v1843, 4
      %v1845 = vrot.slane %v1066, 5
      %v1846 = vsel %vm792, %v1844, %v1845
      %v1847 = vrot.slane %v1845, 4
      %v1848 = vrot.slane %v1067, 5
      %v1849 = vsel %vm792, %v1847, %v1848
      %v1850 = vrot.slane %v1068, 5
      %v1851 = vrot.slane %v1850, 4
      %v1852 = vrot.slane %v1069, 5
      %v1853 = vsel %vm792, %v1851, %v1852
      %v1854 = vrot.slane %v1852, 4
      %v1855 = vrot.slane %v1070, 5
      %v1856 = vsel %vm792, %v1854, %v1855
      %v1857 = vrot.slane %v1071, 5
      %v1858 = vrot.slane %v1857, 4
      %v1859 = vrot.slane %v1072, 5
      %v1860 = vsel %vm792, %v1858, %v1859
      %v1861 = vrot.slane %v1859, 4
      %v1862 = vrot.slane %v1073, 5
      %v1863 = vsel %vm792, %v1861, %v1862
      %v1864 = vrot.slane %v1074, 5
      %v1865 = vrot.slane %v1864, 4
      %v1866 = vrot.slane %v1075, 5
      %v1867 = vsel %vm792, %v1865, %v1866
      %v1868 = vrot.slane %v1866, 4
      %v1869 = vrot.slane %v1076, 5
      %v1870 = vsel %vm792, %v1868, %v1869
      %v1871 = vrot.slane %v1077, 5
      %v1872 = vrot.slane %v1871, 4
      %v1873 = vrot.slane %v1078, 5
      %v1874 = vsel %vm792, %v1872, %v1873
      %v1875 = vrot.slane %v1873, 4
      %v1876 = vrot.slane %v1079, 5
      %v1877 = vsel %vm792, %v1875, %v1876
      %v1878 = vrot.slane %v1080, 5
      %v1879 = vrot.slane %v1878, 4
      %v1880 = vrot.slane %v1081, 5
      %v1881 = vsel %vm792, %v1879, %v1880
      %v1882 = vrot.slane %v1880, 4
      %v1883 = vrot.slane %v1082, 5
      %v1884 = vsel %vm792, %v1882, %v1883
      %1885 = vrot.lane.b32.xlu0 %v1776, 40
      %v1886 = vpop.permute.xlu0 %1885
      %1887 = vrot.lane.b32.xlu0 %v1779, 40
      %v1888 = vpop.permute.xlu0 %1887
      %1889 = vrot.lane.b32.xlu0 %v1783, 40
      %v1890 = vpop.permute.xlu0 %1889
      %1891 = vrot.lane.b32.xlu0 %v1786, 40
      %v1892 = vpop.permute.xlu0 %1891
      %1893 = vrot.lane.b32.xlu0 %v1790, 40
      %v1894 = vpop.permute.xlu0 %1893
      %1895 = vrot.lane.b32.xlu0 %v1793, 40
      %v1896 = vpop.permute.xlu0 %1895
      %1897 = vrot.lane.b32.xlu0 %v1797, 40
      %v1898 = vpop.permute.xlu0 %1897
      %1899 = vrot.lane.b32.xlu0 %v1800, 40
      %v1900 = vpop.permute.xlu0 %1899
      %1901 = vrot.lane.b32.xlu0 %v1804, 40
      %v1902 = vpop.permute.xlu0 %1901
      %1903 = vrot.lane.b32.xlu0 %v1807, 40
      %v1904 = vpop.permute.xlu0 %1903
      %1905 = vrot.lane.b32.xlu0 %v1811, 40
      %v1906 = vpop.permute.xlu0 %1905
      %1907 = vrot.lane.b32.xlu0 %v1814, 40
      %v1908 = vpop.permute.xlu0 %1907
      %1909 = vrot.lane.b32.xlu0 %v1818, 40
      %v1910 = vpop.permute.xlu0 %1909
      %1911 = vrot.lane.b32.xlu0 %v1821, 40
      %v1912 = vpop.permute.xlu0 %1911
      %1913 = vrot.lane.b32.xlu0 %v1825, 40
      %v1914 = vpop.permute.xlu0 %1913
      %1915 = vrot.lane.b32.xlu0 %v1828, 40
      %v1916 = vpop.permute.xlu0 %1915
      %1917 = vrot.lane.b32.xlu0 %v1832, 40
      %v1918 = vpop.permute.xlu0 %1917
      %1919 = vrot.lane.b32.xlu0 %v1835, 40
      %v1920 = vpop.permute.xlu0 %1919
      %1921 = vrot.lane.b32.xlu0 %v1839, 40
      %v1922 = vpop.permute.xlu0 %1921
      %1923 = vrot.lane.b32.xlu0 %v1842, 40
      %v1924 = vpop.permute.xlu0 %1923
      %1925 = vrot.lane.b32.xlu0 %v1846, 40
      %v1926 = vpop.permute.xlu0 %1925
      %1927 = vrot.lane.b32.xlu0 %v1849, 40
      %v1928 = vpop.permute.xlu0 %1927
      %1929 = vrot.lane.b32.xlu0 %v1853, 40
      %v1930 = vpop.permute.xlu0 %1929
      %1931 = vrot.lane.b32.xlu0 %v1856, 40
      %v1932 = vpop.permute.xlu0 %1931
      %1933 = vrot.lane.b32.xlu0 %v1860, 40
      %v1934 = vpop.permute.xlu0 %1933
      %1935 = vrot.lane.b32.xlu0 %v1863, 40
      %v1936 = vpop.permute.xlu0 %1935
      %1937 = vrot.lane.b32.xlu0 %v1867, 40
      %v1938 = vpop.permute.xlu0 %1937
      %1939 = vrot.lane.b32.xlu0 %v1870, 40
      %v1940 = vpop.permute.xlu0 %1939
      %1941 = vrot.lane.b32.xlu0 %v1874, 40
      %v1942 = vpop.permute.xlu0 %1941
      %1943 = vrot.lane.b32.xlu0 %v1877, 40
      %v1944 = vpop.permute.xlu0 %1943
      %1945 = vrot.lane.b32.xlu0 %v1881, 40
      %v1946 = vpop.permute.xlu0 %1945
      %1947 = vrot.lane.b32.xlu0 %v1884, 40
      %v1948 = vpop.permute.xlu0 %1947
      %vm1981 = vcmask 388416
      %1982 = vst.msk [vmem:[#allocation2] sm:$0xf] %vm1981, %v1886
      %1983 = vst.msk [vmem:[#allocation2 + $0x4] sm:$0xf] %vm1981, %v1888
      %1984 = vst.msk [vmem:[#allocation2 + $0x8] sm:$0xf] %vm1981, %v1890
      %1985 = vst.msk [vmem:[#allocation2 + $0xc] sm:$0xf] %vm1981, %v1892
      %1986 = vst.msk [vmem:[#allocation2 + $0x10] sm:$0xf] %vm1981, %v1894
      %1987 = vst.msk [vmem:[#allocation2 + $0x14] sm:$0xf] %vm1981, %v1896
      %1988 = vst.msk [vmem:[#allocation2 + $0x18] sm:$0xf] %vm1981, %v1898
      %1989 = vst.msk [vmem:[#allocation2 + $0x1c] sm:$0xf] %vm1981, %v1900
      %1990 = vst.msk [vmem:[#allocation2 + $0x20] sm:$0xf] %vm1981, %v1902
      %1991 = vst.msk [vmem:[#allocation2 + $0x24] sm:$0xf] %vm1981, %v1904
      %1992 = vst.msk [vmem:[#allocation2 + $0x28] sm:$0xf] %vm1981, %v1906
      %1993 = vst.msk [vmem:[#allocation2 + $0x2c] sm:$0xf] %vm1981, %v1908
      %1994 = vst.msk [vmem:[#allocation2 + $0x30] sm:$0xf] %vm1981, %v1910
      %1995 = vst.msk [vmem:[#allocation2 + $0x34] sm:$0xf] %vm1981, %v1912
      %1996 = vst.msk [vmem:[#allocation2 + $0x38] sm:$0xf] %vm1981, %v1914
      %1997 = vst.msk [vmem:[#allocation2 + $0x3c] sm:$0xf] %vm1981, %v1916
      %1998 = vst.msk [vmem:[#allocation2 + $0x40] sm:$0xf] %vm1981, %v1918
      %1999 = vst.msk [vmem:[#allocation2 + $0x44] sm:$0xf] %vm1981, %v1920
      %2000 = vst.msk [vmem:[#allocation2 + $0x48] sm:$0xf] %vm1981, %v1922
      %2001 = vst.msk [vmem:[#allocation2 + $0x4c] sm:$0xf] %vm1981, %v1924
      %2002 = vst.msk [vmem:[#allocation2 + $0x50] sm:$0xf] %vm1981, %v1926
      %2003 = vst.msk [vmem:[#allocation2 + $0x54] sm:$0xf] %vm1981, %v1928
      %2004 = vst.msk [vmem:[#allocation2 + $0x58] sm:$0xf] %vm1981, %v1930
      %2005 = vst.msk [vmem:[#allocation2 + $0x5c] sm:$0xf] %vm1981, %v1932
      %2006 = vst.msk [vmem:[#allocation2 + $0x60] sm:$0xf] %vm1981, %v1934
      %2007 = vst.msk [vmem:[#allocation2 + $0x64] sm:$0xf] %vm1981, %v1936
      %2008 = vst.msk [vmem:[#allocation2 + $0x68] sm:$0xf] %vm1981, %v1938
      %2009 = vst.msk [vmem:[#allocation2 + $0x6c] sm:$0xf] %vm1981, %v1940
      %2010 = vst.msk [vmem:[#allocation2 + $0x70] sm:$0xf] %vm1981, %v1942
      %2011 = vst.msk [vmem:[#allocation2 + $0x74] sm:$0xf] %vm1981, %v1944
      %2012 = vst.msk [vmem:[#allocation2 + $0x78] sm:$0xf] %vm1981, %v1946
      %2013 = vst.msk [vmem:[#allocation2 + $0x7c] sm:$0xf] %vm1981, %v1948
      %s2014 = scalar_lea.vmem %s138, 24
      %v2015 = vld [vmem:[%s2014] sm:$0xf]
      %v2016 = vld [vmem:[%s2014 + $0x4] sm:$0xf]
      %v2017 = vld [vmem:[%s2014 + $0x8] sm:$0x1]
      %v2018 = vld [vmem:[%s2014 + $0xc] sm:$0xf]
      %v2019 = vld [vmem:[%s2014 + $0x10] sm:$0xf]
      %v2020 = vld [vmem:[%s2014 + $0x14] sm:$0x1]
      %v2021 = vld [vmem:[%s2014 + $0x18] sm:$0xf]
      %v2022 = vld [vmem:[%s2014 + $0x1c] sm:$0xf]
      %v2023 = vld [vmem:[%s2014 + $0x20] sm:$0x1]
      %v2024 = vld [vmem:[%s2014 + $0x24] sm:$0xf]
      %v2025 = vld [vmem:[%s2014 + $0x28] sm:$0xf]
      %v2026 = vld [vmem:[%s2014 + $0x2c] sm:$0x1]
      %v2027 = vld [vmem:[%s2014 + $0x30] sm:$0xf]
      %v2028 = vld [vmem:[%s2014 + $0x34] sm:$0xf]
      %v2029 = vld [vmem:[%s2014 + $0x38] sm:$0x1]
      %v2030 = vld [vmem:[%s2014 + $0x3c] sm:$0xf]
      %v2031 = vld [vmem:[%s2014 + $0x40] sm:$0xf]
      %v2032 = vld [vmem:[%s2014 + $0x44] sm:$0x1]
      %v2033 = vld [vmem:[%s2014 + $0x48] sm:$0xf]
      %v2034 = vld [vmem:[%s2014 + $0x4c] sm:$0xf]
      %v2035 = vld [vmem:[%s2014 + $0x50] sm:$0x1]
      %v2036 = vld [vmem:[%s2014 + $0x54] sm:$0xf]
      %v2037 = vld [vmem:[%s2014 + $0x58] sm:$0xf]
      %v2038 = vld [vmem:[%s2014 + $0x5c] sm:$0x1]
      %v2039 = vld [vmem:[%s2014 + $0x60] sm:$0xf]
      %v2040 = vld [vmem:[%s2014 + $0x64] sm:$0xf]
      %v2041 = vld [vmem:[%s2014 + $0x68] sm:$0x1]
      %v2042 = vld [vmem:[%s2014 + $0x6c] sm:$0xf]
      %v2043 = vld [vmem:[%s2014 + $0x70] sm:$0xf]
      %v2044 = vld [vmem:[%s2014 + $0x74] sm:$0x1]
      %v2045 = vld [vmem:[%s2014 + $0x78] sm:$0xf]
      %v2046 = vld [vmem:[%s2014 + $0x7c] sm:$0xf]
      %v2047 = vld [vmem:[%s2014 + $0x80] sm:$0x1]
      %v2048 = vld [vmem:[%s2014 + $0x84] sm:$0xf]
      %v2049 = vld [vmem:[%s2014 + $0x88] sm:$0xf]
      %v2050 = vld [vmem:[%s2014 + $0x8c] sm:$0x1]
      %v2051 = vld [vmem:[%s2014 + $0x90] sm:$0xf]
      %v2052 = vld [vmem:[%s2014 + $0x94] sm:$0xf]
      %v2053 = vld [vmem:[%s2014 + $0x98] sm:$0x1]
      %v2054 = vld [vmem:[%s2014 + $0x9c] sm:$0xf]
      %v2055 = vld [vmem:[%s2014 + $0xa0] sm:$0xf]
      %v2056 = vld [vmem:[%s2014 + $0xa4] sm:$0x1]
      %v2057 = vld [vmem:[%s2014 + $0xa8] sm:$0xf]
      %v2058 = vld [vmem:[%s2014 + $0xac] sm:$0xf]
      %v2059 = vld [vmem:[%s2014 + $0xb0] sm:$0x1]
      %v2060 = vld [vmem:[%s2014 + $0xb4] sm:$0xf]
      %v2061 = vld [vmem:[%s2014 + $0xb8] sm:$0xf]
      %v2062 = vld [vmem:[%s2014 + $0xbc] sm:$0x1]
      %2095 = vrot.lane.b32.xlu0 %v2015, 48
      %v2096 = vpop.permute.xlu0 %2095
      %2097 = vrot.lane.b32.xlu0 %v2016, 48
      %v2098 = vpop.permute.xlu0 %2097
      %2099 = vrot.lane.b32.xlu0 %v2018, 48
      %v2100 = vpop.permute.xlu0 %2099
      %2101 = vrot.lane.b32.xlu0 %v2019, 48
      %v2102 = vpop.permute.xlu0 %2101
      %2103 = vrot.lane.b32.xlu0 %v2021, 48
      %v2104 = vpop.permute.xlu0 %2103
      %2105 = vrot.lane.b32.xlu0 %v2022, 48
      %v2106 = vpop.permute.xlu0 %2105
      %2107 = vrot.lane.b32.xlu0 %v2024, 48
      %v2108 = vpop.permute.xlu0 %2107
      %2109 = vrot.lane.b32.xlu0 %v2025, 48
      %v2110 = vpop.permute.xlu0 %2109
      %2111 = vrot.lane.b32.xlu0 %v2027, 48
      %v2112 = vpop.permute.xlu0 %2111
      %2113 = vrot.lane.b32.xlu0 %v2028, 48
      %v2114 = vpop.permute.xlu0 %2113
      %2115 = vrot.lane.b32.xlu0 %v2030, 48
      %v2116 = vpop.permute.xlu0 %2115
      %2117 = vrot.lane.b32.xlu0 %v2031, 48
      %v2118 = vpop.permute.xlu0 %2117
      %2119 = vrot.lane.b32.xlu0 %v2033, 48
      %v2120 = vpop.permute.xlu0 %2119
      %2121 = vrot.lane.b32.xlu0 %v2034, 48
      %v2122 = vpop.permute.xlu0 %2121
      %2123 = vrot.lane.b32.xlu0 %v2036, 48
      %v2124 = vpop.permute.xlu0 %2123
      %2125 = vrot.lane.b32.xlu0 %v2037, 48
      %v2126 = vpop.permute.xlu0 %2125
      %2127 = vrot.lane.b32.xlu0 %v2039, 48
      %v2128 = vpop.permute.xlu0 %2127
      %2129 = vrot.lane.b32.xlu0 %v2040, 48
      %v2130 = vpop.permute.xlu0 %2129
      %2131 = vrot.lane.b32.xlu0 %v2042, 48
      %v2132 = vpop.permute.xlu0 %2131
      %2133 = vrot.lane.b32.xlu0 %v2043, 48
      %v2134 = vpop.permute.xlu0 %2133
      %2135 = vrot.lane.b32.xlu0 %v2045, 48
      %v2136 = vpop.permute.xlu0 %2135
      %2137 = vrot.lane.b32.xlu0 %v2046, 48
      %v2138 = vpop.permute.xlu0 %2137
      %2139 = vrot.lane.b32.xlu0 %v2048, 48
      %v2140 = vpop.permute.xlu0 %2139
      %2141 = vrot.lane.b32.xlu0 %v2049, 48
      %v2142 = vpop.permute.xlu0 %2141
      %2143 = vrot.lane.b32.xlu0 %v2051, 48
      %v2144 = vpop.permute.xlu0 %2143
      %2145 = vrot.lane.b32.xlu0 %v2052, 48
      %v2146 = vpop.permute.xlu0 %2145
      %2147 = vrot.lane.b32.xlu0 %v2054, 48
      %v2148 = vpop.permute.xlu0 %2147
      %2149 = vrot.lane.b32.xlu0 %v2055, 48
      %v2150 = vpop.permute.xlu0 %2149
      %2151 = vrot.lane.b32.xlu0 %v2057, 48
      %v2152 = vpop.permute.xlu0 %2151
      %2153 = vrot.lane.b32.xlu0 %v2058, 48
      %v2154 = vpop.permute.xlu0 %2153
      %2155 = vrot.lane.b32.xlu0 %v2060, 48
      %v2156 = vpop.permute.xlu0 %2155
      %2157 = vrot.lane.b32.xlu0 %v2061, 48
      %v2158 = vpop.permute.xlu0 %2157
      %vm2191 = vcmask 454016
      %2192 = vst.msk [vmem:[#allocation2] sm:$0xf] %vm2191, %v2096
      %2193 = vst.msk [vmem:[#allocation2 + $0x4] sm:$0xf] %vm2191, %v2098
      %2194 = vst.msk [vmem:[#allocation2 + $0x8] sm:$0xf] %vm2191, %v2100
      %2195 = vst.msk [vmem:[#allocation2 + $0xc] sm:$0xf] %vm2191, %v2102
      %2196 = vst.msk [vmem:[#allocation2 + $0x10] sm:$0xf] %vm2191, %v2104
      %2197 = vst.msk [vmem:[#allocation2 + $0x14] sm:$0xf] %vm2191, %v2106
      %2198 = vst.msk [vmem:[#allocation2 + $0x18] sm:$0xf] %vm2191, %v2108
      %2199 = vst.msk [vmem:[#allocation2 + $0x1c] sm:$0xf] %vm2191, %v2110
      %2200 = vst.msk [vmem:[#allocation2 + $0x20] sm:$0xf] %vm2191, %v2112
      %2201 = vst.msk [vmem:[#allocation2 + $0x24] sm:$0xf] %vm2191, %v2114
      %2202 = vst.msk [vmem:[#allocation2 + $0x28] sm:$0xf] %vm2191, %v2116
      %2203 = vst.msk [vmem:[#allocation2 + $0x2c] sm:$0xf] %vm2191, %v2118
      %2204 = vst.msk [vmem:[#allocation2 + $0x30] sm:$0xf] %vm2191, %v2120
      %2205 = vst.msk [vmem:[#allocation2 + $0x34] sm:$0xf] %vm2191, %v2122
      %2206 = vst.msk [vmem:[#allocation2 + $0x38] sm:$0xf] %vm2191, %v2124
      %2207 = vst.msk [vmem:[#allocation2 + $0x3c] sm:$0xf] %vm2191, %v2126
      %2208 = vst.msk [vmem:[#allocation2 + $0x40] sm:$0xf] %vm2191, %v2128
      %2209 = vst.msk [vmem:[#allocation2 + $0x44] sm:$0xf] %vm2191, %v2130
      %2210 = vst.msk [vmem:[#allocation2 + $0x48] sm:$0xf] %vm2191, %v2132
      %2211 = vst.msk [vmem:[#allocation2 + $0x4c] sm:$0xf] %vm2191, %v2134
      %2212 = vst.msk [vmem:[#allocation2 + $0x50] sm:$0xf] %vm2191, %v2136
      %2213 = vst.msk [vmem:[#allocation2 + $0x54] sm:$0xf] %vm2191, %v2138
      %2214 = vst.msk [vmem:[#allocation2 + $0x58] sm:$0xf] %vm2191, %v2140
      %2215 = vst.msk [vmem:[#allocation2 + $0x5c] sm:$0xf] %vm2191, %v2142
      %2216 = vst.msk [vmem:[#allocation2 + $0x60] sm:$0xf] %vm2191, %v2144
      %2217 = vst.msk [vmem:[#allocation2 + $0x64] sm:$0xf] %vm2191, %v2146
      %2218 = vst.msk [vmem:[#allocation2 + $0x68] sm:$0xf] %vm2191, %v2148
      %2219 = vst.msk [vmem:[#allocation2 + $0x6c] sm:$0xf] %vm2191, %v2150
      %2220 = vst.msk [vmem:[#allocation2 + $0x70] sm:$0xf] %vm2191, %v2152
      %2221 = vst.msk [vmem:[#allocation2 + $0x74] sm:$0xf] %vm2191, %v2154
      %2222 = vst.msk [vmem:[#allocation2 + $0x78] sm:$0xf] %vm2191, %v2156
      %2223 = vst.msk [vmem:[#allocation2 + $0x7c] sm:$0xf] %vm2191, %v2158
      %v2225 = vshrl.u32 %v2015, 16
      %v2227 = vrot.slane %v2225, 4
      %v2228 = vshll.u32 %v2015, 16
      %v2230 = vrot.slane %v2228, 5
      %v2231 = vor.u32 %v2227, %v2230
      %v2232 = vrot.slane %v2231, 4
      %v2234 = vshll.u32 %v2016, 16
      %v2236 = vrot.slane %v2234, 5
      %v2237 = vsel %vm228, %v2232, %v2236
      %v2238 = vshrl.u32 %v2016, 16
      %v2240 = vrot.slane %v2238, 4
      %v2241 = vor.u32 %v2240, %v2236
      %v2242 = vrot.slane %v2241, 4
      %v2244 = vshll.u32 %v2017, 16
      %v2246 = vrot.slane %v2244, 5
      %v2247 = vsel %vm228, %v2242, %v2246
      %v2249 = vshrl.u32 %v2018, 16
      %v2251 = vrot.slane %v2249, 4
      %v2252 = vshll.u32 %v2018, 16
      %v2254 = vrot.slane %v2252, 5
      %v2255 = vor.u32 %v2251, %v2254
      %v2256 = vrot.slane %v2255, 4
      %v2258 = vshll.u32 %v2019, 16
      %v2260 = vrot.slane %v2258, 5
      %v2261 = vsel %vm228, %v2256, %v2260
      %v2262 = vshrl.u32 %v2019, 16
      %v2264 = vrot.slane %v2262, 4
      %v2265 = vor.u32 %v2264, %v2260
      %v2266 = vrot.slane %v2265, 4
      %v2268 = vshll.u32 %v2020, 16
      %v2270 = vrot.slane %v2268, 5
      %v2271 = vsel %vm228, %v2266, %v2270
      %v2273 = vshrl.u32 %v2021, 16
      %v2275 = vrot.slane %v2273, 4
      %v2276 = vshll.u32 %v2021, 16
      %v2278 = vrot.slane %v2276, 5
      %v2279 = vor.u32 %v2275, %v2278
      %v2280 = vrot.slane %v2279, 4
      %v2282 = vshll.u32 %v2022, 16
      %v2284 = vrot.slane %v2282, 5
      %v2285 = vsel %vm228, %v2280, %v2284
      %v2286 = vshrl.u32 %v2022, 16
      %v2288 = vrot.slane %v2286, 4
      %v2289 = vor.u32 %v2288, %v2284
      %v2290 = vrot.slane %v2289, 4
      %v2292 = vshll.u32 %v2023, 16
      %v2294 = vrot.slane %v2292, 5
      %v2295 = vsel %vm228, %v2290, %v2294
      %v2297 = vshrl.u32 %v2024, 16
      %v2299 = vrot.slane %v2297, 4
      %v2300 = vshll.u32 %v2024, 16
      %v2302 = vrot.slane %v2300, 5
      %v2303 = vor.u32 %v2299, %v2302
      %v2304 = vrot.slane %v2303, 4
      %v2306 = vshll.u32 %v2025, 16
      %v2308 = vrot.slane %v2306, 5
      %v2309 = vsel %vm228, %v2304, %v2308
      %v2310 = vshrl.u32 %v2025, 16
      %v2312 = vrot.slane %v2310, 4
      %v2313 = vor.u32 %v2312, %v2308
      %v2314 = vrot.slane %v2313, 4
      %v2316 = vshll.u32 %v2026, 16
      %v2318 = vrot.slane %v2316, 5
      %v2319 = vsel %vm228, %v2314, %v2318
      %v2321 = vshrl.u32 %v2027, 16
      %v2323 = vrot.slane %v2321, 4
      %v2324 = vshll.u32 %v2027, 16
      %v2326 = vrot.slane %v2324, 5
      %v2327 = vor.u32 %v2323, %v2326
      %v2328 = vrot.slane %v2327, 4
      %v2330 = vshll.u32 %v2028, 16
      %v2332 = vrot.slane %v2330, 5
      %v2333 = vsel %vm228, %v2328, %v2332
      %v2334 = vshrl.u32 %v2028, 16
      %v2336 = vrot.slane %v2334, 4
      %v2337 = vor.u32 %v2336, %v2332
      %v2338 = vrot.slane %v2337, 4
      %v2340 = vshll.u32 %v2029, 16
      %v2342 = vrot.slane %v2340, 5
      %v2343 = vsel %vm228, %v2338, %v2342
      %v2345 = vshrl.u32 %v2030, 16
      %v2347 = vrot.slane %v2345, 4
      %v2348 = vshll.u32 %v2030, 16
      %v2350 = vrot.slane %v2348, 5
      %v2351 = vor.u32 %v2347, %v2350
      %v2352 = vrot.slane %v2351, 4
      %v2354 = vshll.u32 %v2031, 16
      %v2356 = vrot.slane %v2354, 5
      %v2357 = vsel %vm228, %v2352, %v2356
      %v2358 = vshrl.u32 %v2031, 16
      %v2360 = vrot.slane %v2358, 4
      %v2361 = vor.u32 %v2360, %v2356
      %v2362 = vrot.slane %v2361, 4
      %v2364 = vshll.u32 %v2032, 16
      %v2366 = vrot.slane %v2364, 5
      %v2367 = vsel %vm228, %v2362, %v2366
      %v2369 = vshrl.u32 %v2033, 16
      %v2371 = vrot.slane %v2369, 4
      %v2372 = vshll.u32 %v2033, 16
      %v2374 = vrot.slane %v2372, 5
      %v2375 = vor.u32 %v2371, %v2374
      %v2376 = vrot.slane %v2375, 4
      %v2378 = vshll.u32 %v2034, 16
      %v2380 = vrot.slane %v2378, 5
      %v2381 = vsel %vm228, %v2376, %v2380
      %v2382 = vshrl.u32 %v2034, 16
      %v2384 = vrot.slane %v2382, 4
      %v2385 = vor.u32 %v2384, %v2380
      %v2386 = vrot.slane %v2385, 4
      %v2388 = vshll.u32 %v2035, 16
      %v2390 = vrot.slane %v2388, 5
      %v2391 = vsel %vm228, %v2386, %v2390
      %v2393 = vshrl.u32 %v2036, 16
      %v2395 = vrot.slane %v2393, 4
      %v2396 = vshll.u32 %v2036, 16
      %v2398 = vrot.slane %v2396, 5
      %v2399 = vor.u32 %v2395, %v2398
      %v2400 = vrot.slane %v2399, 4
      %v2402 = vshll.u32 %v2037, 16
      %v2404 = vrot.slane %v2402, 5
      %v2405 = vsel %vm228, %v2400, %v2404
      %v2406 = vshrl.u32 %v2037, 16
      %v2408 = vrot.slane %v2406, 4
      %v2409 = vor.u32 %v2408, %v2404
      %v2410 = vrot.slane %v2409, 4
      %v2412 = vshll.u32 %v2038, 16
      %v2414 = vrot.slane %v2412, 5
      %v2415 = vsel %vm228, %v2410, %v2414
      %v2417 = vshrl.u32 %v2039, 16
      %v2419 = vrot.slane %v2417, 4
      %v2420 = vshll.u32 %v2039, 16
      %v2422 = vrot.slane %v2420, 5
      %v2423 = vor.u32 %v2419, %v2422
      %v2424 = vrot.slane %v2423, 4
      %v2426 = vshll.u32 %v2040, 16
      %v2428 = vrot.slane %v2426, 5
      %v2429 = vsel %vm228, %v2424, %v2428
      %v2430 = vshrl.u32 %v2040, 16
      %v2432 = vrot.slane %v2430, 4
      %v2433 = vor.u32 %v2432, %v2428
      %v2434 = vrot.slane %v2433, 4
      %v2436 = vshll.u32 %v2041, 16
      %v2438 = vrot.slane %v2436, 5
      %v2439 = vsel %vm228, %v2434, %v2438
      %v2441 = vshrl.u32 %v2042, 16
      %v2443 = vrot.slane %v2441, 4
      %v2444 = vshll.u32 %v2042, 16
      %v2446 = vrot.slane %v2444, 5
      %v2447 = vor.u32 %v2443, %v2446
      %v2448 = vrot.slane %v2447, 4
      %v2450 = vshll.u32 %v2043, 16
      %v2452 = vrot.slane %v2450, 5
      %v2453 = vsel %vm228, %v2448, %v2452
      %v2454 = vshrl.u32 %v2043, 16
      %v2456 = vrot.slane %v2454, 4
      %v2457 = vor.u32 %v2456, %v2452
      %v2458 = vrot.slane %v2457, 4
      %v2460 = vshll.u32 %v2044, 16
      %v2462 = vrot.slane %v2460, 5
      %v2463 = vsel %vm228, %v2458, %v2462
      %v2465 = vshrl.u32 %v2045, 16
      %v2467 = vrot.slane %v2465, 4
      %v2468 = vshll.u32 %v2045, 16
      %v2470 = vrot.slane %v2468, 5
      %v2471 = vor.u32 %v2467, %v2470
      %v2472 = vrot.slane %v2471, 4
      %v2474 = vshll.u32 %v2046, 16
      %v2476 = vrot.slane %v2474, 5
      %v2477 = vsel %vm228, %v2472, %v2476
      %v2478 = vshrl.u32 %v2046, 16
      %v2480 = vrot.slane %v2478, 4
      %v2481 = vor.u32 %v2480, %v2476
      %v2482 = vrot.slane %v2481, 4
      %v2484 = vshll.u32 %v2047, 16
      %v2486 = vrot.slane %v2484, 5
      %v2487 = vsel %vm228, %v2482, %v2486
      %v2489 = vshrl.u32 %v2048, 16
      %v2491 = vrot.slane %v2489, 4
      %v2492 = vshll.u32 %v2048, 16
      %v2494 = vrot.slane %v2492, 5
      %v2495 = vor.u32 %v2491, %v2494
      %v2496 = vrot.slane %v2495, 4
      %v2498 = vshll.u32 %v2049, 16
      %v2500 = vrot.slane %v2498, 5
      %v2501 = vsel %vm228, %v2496, %v2500
      %v2502 = vshrl.u32 %v2049, 16
      %v2504 = vrot.slane %v2502, 4
      %v2505 = vor.u32 %v2504, %v2500
      %v2506 = vrot.slane %v2505, 4
      %v2508 = vshll.u32 %v2050, 16
      %v2510 = vrot.slane %v2508, 5
      %v2511 = vsel %vm228, %v2506, %v2510
      %v2513 = vshrl.u32 %v2051, 16
      %v2515 = vrot.slane %v2513, 4
      %v2516 = vshll.u32 %v2051, 16
      %v2518 = vrot.slane %v2516, 5
      %v2519 = vor.u32 %v2515, %v2518
      %v2520 = vrot.slane %v2519, 4
      %v2522 = vshll.u32 %v2052, 16
      %v2524 = vrot.slane %v2522, 5
      %v2525 = vsel %vm228, %v2520, %v2524
      %v2526 = vshrl.u32 %v2052, 16
      %v2528 = vrot.slane %v2526, 4
      %v2529 = vor.u32 %v2528, %v2524
      %v2530 = vrot.slane %v2529, 4
      %v2532 = vshll.u32 %v2053, 16
      %v2534 = vrot.slane %v2532, 5
      %v2535 = vsel %vm228, %v2530, %v2534
      %v2537 = vshrl.u32 %v2054, 16
      %v2539 = vrot.slane %v2537, 4
      %v2540 = vshll.u32 %v2054, 16
      %v2542 = vrot.slane %v2540, 5
      %v2543 = vor.u32 %v2539, %v2542
      %v2544 = vrot.slane %v2543, 4
      %v2546 = vshll.u32 %v2055, 16
      %v2548 = vrot.slane %v2546, 5
      %v2549 = vsel %vm228, %v2544, %v2548
      %v2550 = vshrl.u32 %v2055, 16
      %v2552 = vrot.slane %v2550, 4
      %v2553 = vor.u32 %v2552, %v2548
      %v2554 = vrot.slane %v2553, 4
      %v2556 = vshll.u32 %v2056, 16
      %v2558 = vrot.slane %v2556, 5
      %v2559 = vsel %vm228, %v2554, %v2558
      %v2561 = vshrl.u32 %v2057, 16
      %v2563 = vrot.slane %v2561, 4
      %v2564 = vshll.u32 %v2057, 16
      %v2566 = vrot.slane %v2564, 5
      %v2567 = vor.u32 %v2563, %v2566
      %v2568 = vrot.slane %v2567, 4
      %v2570 = vshll.u32 %v2058, 16
      %v2572 = vrot.slane %v2570, 5
      %v2573 = vsel %vm228, %v2568, %v2572
      %v2574 = vshrl.u32 %v2058, 16
      %v2576 = vrot.slane %v2574, 4
      %v2577 = vor.u32 %v2576, %v2572
      %v2578 = vrot.slane %v2577, 4
      %v2580 = vshll.u32 %v2059, 16
      %v2582 = vrot.slane %v2580, 5
      %v2583 = vsel %vm228, %v2578, %v2582
      %v2585 = vshrl.u32 %v2060, 16
      %v2587 = vrot.slane %v2585, 4
      %v2588 = vshll.u32 %v2060, 16
      %v2590 = vrot.slane %v2588, 5
      %v2591 = vor.u32 %v2587, %v2590
      %v2592 = vrot.slane %v2591, 4
      %v2594 = vshll.u32 %v2061, 16
      %v2596 = vrot.slane %v2594, 5
      %v2597 = vsel %vm228, %v2592, %v2596
      %v2598 = vshrl.u32 %v2061, 16
      %v2600 = vrot.slane %v2598, 4
      %v2601 = vor.u32 %v2600, %v2596
      %v2602 = vrot.slane %v2601, 4
      %v2604 = vshll.u32 %v2062, 16
      %v2606 = vrot.slane %v2604, 5
      %v2607 = vsel %vm228, %v2602, %v2606
      %2608 = vrot.lane.b32.xlu0 %v2237, 56
      %v2609 = vpop.permute.xlu0 %2608
      %2610 = vrot.lane.b32.xlu0 %v2247, 56
      %v2611 = vpop.permute.xlu0 %2610
      %2612 = vrot.lane.b32.xlu0 %v2261, 56
      %v2613 = vpop.permute.xlu0 %2612
      %2614 = vrot.lane.b32.xlu0 %v2271, 56
      %v2615 = vpop.permute.xlu0 %2614
      %2616 = vrot.lane.b32.xlu0 %v2285, 56
      %v2617 = vpop.permute.xlu0 %2616
      %2618 = vrot.lane.b32.xlu0 %v2295, 56
      %v2619 = vpop.permute.xlu0 %2618
      %2620 = vrot.lane.b32.xlu0 %v2309, 56
      %v2621 = vpop.permute.xlu0 %2620
      %2622 = vrot.lane.b32.xlu0 %v2319, 56
      %v2623 = vpop.permute.xlu0 %2622
      %2624 = vrot.lane.b32.xlu0 %v2333, 56
      %v2625 = vpop.permute.xlu0 %2624
      %2626 = vrot.lane.b32.xlu0 %v2343, 56
      %v2627 = vpop.permute.xlu0 %2626
      %2628 = vrot.lane.b32.xlu0 %v2357, 56
      %v2629 = vpop.permute.xlu0 %2628
      %2630 = vrot.lane.b32.xlu0 %v2367, 56
      %v2631 = vpop.permute.xlu0 %2630
      %2632 = vrot.lane.b32.xlu0 %v2381, 56
      %v2633 = vpop.permute.xlu0 %2632
      %2634 = vrot.lane.b32.xlu0 %v2391, 56
      %v2635 = vpop.permute.xlu0 %2634
      %2636 = vrot.lane.b32.xlu0 %v2405, 56
      %v2637 = vpop.permute.xlu0 %2636
      %2638 = vrot.lane.b32.xlu0 %v2415, 56
      %v2639 = vpop.permute.xlu0 %2638
      %2640 = vrot.lane.b32.xlu0 %v2429, 56
      %v2641 = vpop.permute.xlu0 %2640
      %2642 = vrot.lane.b32.xlu0 %v2439, 56
      %v2643 = vpop.permute.xlu0 %2642
      %2644 = vrot.lane.b32.xlu0 %v2453, 56
      %v2645 = vpop.permute.xlu0 %2644
      %2646 = vrot.lane.b32.xlu0 %v2463, 56
      %v2647 = vpop.permute.xlu0 %2646
      %2648 = vrot.lane.b32.xlu0 %v2477, 56
      %v2649 = vpop.permute.xlu0 %2648
      %2650 = vrot.lane.b32.xlu0 %v2487, 56
      %v2651 = vpop.permute.xlu0 %2650
      %2652 = vrot.lane.b32.xlu0 %v2501, 56
      %v2653 = vpop.permute.xlu0 %2652
      %2654 = vrot.lane.b32.xlu0 %v2511, 56
      %v2655 = vpop.permute.xlu0 %2654
      %2656 = vrot.lane.b32.xlu0 %v2525, 56
      %v2657 = vpop.permute.xlu0 %2656
      %2658 = vrot.lane.b32.xlu0 %v2535, 56
      %v2659 = vpop.permute.xlu0 %2658
      %2660 = vrot.lane.b32.xlu0 %v2549, 56
      %v2661 = vpop.permute.xlu0 %2660
      %2662 = vrot.lane.b32.xlu0 %v2559, 56
      %v2663 = vpop.permute.xlu0 %2662
      %2664 = vrot.lane.b32.xlu0 %v2573, 56
      %v2665 = vpop.permute.xlu0 %2664
      %2666 = vrot.lane.b32.xlu0 %v2583, 56
      %v2667 = vpop.permute.xlu0 %2666
      %2668 = vrot.lane.b32.xlu0 %v2597, 56
      %v2669 = vpop.permute.xlu0 %2668
      %2670 = vrot.lane.b32.xlu0 %v2607, 56
      %v2671 = vpop.permute.xlu0 %2670
      %vm2704 = vcmask 519616
      %2705 = vst.msk [vmem:[#allocation2] sm:$0xf] %vm2704, %v2609
      %2706 = vst.msk [vmem:[#allocation2 + $0x4] sm:$0xf] %vm2704, %v2611
      %2707 = vst.msk [vmem:[#allocation2 + $0x8] sm:$0xf] %vm2704, %v2613
      %2708 = vst.msk [vmem:[#allocation2 + $0xc] sm:$0xf] %vm2704, %v2615
      %2709 = vst.msk [vmem:[#allocation2 + $0x10] sm:$0xf] %vm2704, %v2617
      %2710 = vst.msk [vmem:[#allocation2 + $0x14] sm:$0xf] %vm2704, %v2619
      %2711 = vst.msk [vmem:[#allocation2 + $0x18] sm:$0xf] %vm2704, %v2621
      %2712 = vst.msk [vmem:[#allocation2 + $0x1c] sm:$0xf] %vm2704, %v2623
      %2713 = vst.msk [vmem:[#allocation2 + $0x20] sm:$0xf] %vm2704, %v2625
      %2714 = vst.msk [vmem:[#allocation2 + $0x24] sm:$0xf] %vm2704, %v2627
      %2715 = vst.msk [vmem:[#allocation2 + $0x28] sm:$0xf] %vm2704, %v2629
      %2716 = vst.msk [vmem:[#allocation2 + $0x2c] sm:$0xf] %vm2704, %v2631
      %2717 = vst.msk [vmem:[#allocation2 + $0x30] sm:$0xf] %vm2704, %v2633
      %2718 = vst.msk [vmem:[#allocation2 + $0x34] sm:$0xf] %vm2704, %v2635
      %2719 = vst.msk [vmem:[#allocation2 + $0x38] sm:$0xf] %vm2704, %v2637
      %2720 = vst.msk [vmem:[#allocation2 + $0x3c] sm:$0xf] %vm2704, %v2639
      %2721 = vst.msk [vmem:[#allocation2 + $0x40] sm:$0xf] %vm2704, %v2641
      %2722 = vst.msk [vmem:[#allocation2 + $0x44] sm:$0xf] %vm2704, %v2643
      %2723 = vst.msk [vmem:[#allocation2 + $0x48] sm:$0xf] %vm2704, %v2645
      %2724 = vst.msk [vmem:[#allocation2 + $0x4c] sm:$0xf] %vm2704, %v2647
      %2725 = vst.msk [vmem:[#allocation2 + $0x50] sm:$0xf] %vm2704, %v2649
      %2726 = vst.msk [vmem:[#allocation2 + $0x54] sm:$0xf] %vm2704, %v2651
      %2727 = vst.msk [vmem:[#allocation2 + $0x58] sm:$0xf] %vm2704, %v2653
      %2728 = vst.msk [vmem:[#allocation2 + $0x5c] sm:$0xf] %vm2704, %v2655
      %2729 = vst.msk [vmem:[#allocation2 + $0x60] sm:$0xf] %vm2704, %v2657
      %2730 = vst.msk [vmem:[#allocation2 + $0x64] sm:$0xf] %vm2704, %v2659
      %2731 = vst.msk [vmem:[#allocation2 + $0x68] sm:$0xf] %vm2704, %v2661
      %2732 = vst.msk [vmem:[#allocation2 + $0x6c] sm:$0xf] %vm2704, %v2663
      %2733 = vst.msk [vmem:[#allocation2 + $0x70] sm:$0xf] %vm2704, %v2665
      %2734 = vst.msk [vmem:[#allocation2 + $0x74] sm:$0xf] %vm2704, %v2667
      %2735 = vst.msk [vmem:[#allocation2 + $0x78] sm:$0xf] %vm2704, %v2669
      %2736 = vst.msk [vmem:[#allocation2 + $0x7c] sm:$0xf] %vm2704, %v2671
      %v2753 = vrot.slane %v2015, 5
      %v2754 = vrot.slane %v2753, 4
      %v2755 = vrot.slane %v2016, 5
      %v2756 = vsel %vm792, %v2754, %v2755
      %v2757 = vrot.slane %v2755, 4
      %v2758 = vrot.slane %v2017, 5
      %v2759 = vsel %vm792, %v2757, %v2758
      %v2760 = vrot.slane %v2018, 5
      %v2761 = vrot.slane %v2760, 4
      %v2762 = vrot.slane %v2019, 5
      %v2763 = vsel %vm792, %v2761, %v2762
      %v2764 = vrot.slane %v2762, 4
      %v2765 = vrot.slane %v2020, 5
      %v2766 = vsel %vm792, %v2764, %v2765
      %v2767 = vrot.slane %v2021, 5
      %v2768 = vrot.slane %v2767, 4
      %v2769 = vrot.slane %v2022, 5
      %v2770 = vsel %vm792, %v2768, %v2769
      %v2771 = vrot.slane %v2769, 4
      %v2772 = vrot.slane %v2023, 5
      %v2773 = vsel %vm792, %v2771, %v2772
      %v2774 = vrot.slane %v2024, 5
      %v2775 = vrot.slane %v2774, 4
      %v2776 = vrot.slane %v2025, 5
      %v2777 = vsel %vm792, %v2775, %v2776
      %v2778 = vrot.slane %v2776, 4
      %v2779 = vrot.slane %v2026, 5
      %v2780 = vsel %vm792, %v2778, %v2779
      %v2781 = vrot.slane %v2027, 5
      %v2782 = vrot.slane %v2781, 4
      %v2783 = vrot.slane %v2028, 5
      %v2784 = vsel %vm792, %v2782, %v2783
      %v2785 = vrot.slane %v2783, 4
      %v2786 = vrot.slane %v2029, 5
      %v2787 = vsel %vm792, %v2785, %v2786
      %v2788 = vrot.slane %v2030, 5
      %v2789 = vrot.slane %v2788, 4
      %v2790 = vrot.slane %v2031, 5
      %v2791 = vsel %vm792, %v2789, %v2790
      %v2792 = vrot.slane %v2790, 4
      %v2793 = vrot.slane %v2032, 5
      %v2794 = vsel %vm792, %v2792, %v2793
      %v2795 = vrot.slane %v2033, 5
      %v2796 = vrot.slane %v2795, 4
      %v2797 = vrot.slane %v2034, 5
      %v2798 = vsel %vm792, %v2796, %v2797
      %v2799 = vrot.slane %v2797, 4
      %v2800 = vrot.slane %v2035, 5
      %v2801 = vsel %vm792, %v2799, %v2800
      %v2802 = vrot.slane %v2036, 5
      %v2803 = vrot.slane %v2802, 4
      %v2804 = vrot.slane %v2037, 5
      %v2805 = vsel %vm792, %v2803, %v2804
      %v2806 = vrot.slane %v2804, 4
      %v2807 = vrot.slane %v2038, 5
      %v2808 = vsel %vm792, %v2806, %v2807
      %v2809 = vrot.slane %v2039, 5
      %v2810 = vrot.slane %v2809, 4
      %v2811 = vrot.slane %v2040, 5
      %v2812 = vsel %vm792, %v2810, %v2811
      %v2813 = vrot.slane %v2811, 4
      %v2814 = vrot.slane %v2041, 5
      %v2815 = vsel %vm792, %v2813, %v2814
      %v2816 = vrot.slane %v2042, 5
      %v2817 = vrot.slane %v2816, 4
      %v2818 = vrot.slane %v2043, 5
      %v2819 = vsel %vm792, %v2817, %v2818
      %v2820 = vrot.slane %v2818, 4
      %v2821 = vrot.slane %v2044, 5
      %v2822 = vsel %vm792, %v2820, %v2821
      %v2823 = vrot.slane %v2045, 5
      %v2824 = vrot.slane %v2823, 4
      %v2825 = vrot.slane %v2046, 5
      %v2826 = vsel %vm792, %v2824, %v2825
      %v2827 = vrot.slane %v2825, 4
      %v2828 = vrot.slane %v2047, 5
      %v2829 = vsel %vm792, %v2827, %v2828
      %v2830 = vrot.slane %v2048, 5
      %v2831 = vrot.slane %v2830, 4
      %v2832 = vrot.slane %v2049, 5
      %v2833 = vsel %vm792, %v2831, %v2832
      %v2834 = vrot.slane %v2832, 4
      %v2835 = vrot.slane %v2050, 5
      %v2836 = vsel %vm792, %v2834, %v2835
      %v2837 = vrot.slane %v2051, 5
      %v2838 = vrot.slane %v2837, 4
      %v2839 = vrot.slane %v2052, 5
      %v2840 = vsel %vm792, %v2838, %v2839
      %v2841 = vrot.slane %v2839, 4
      %v2842 = vrot.slane %v2053, 5
      %v2843 = vsel %vm792, %v2841, %v2842
      %v2844 = vrot.slane %v2054, 5
      %v2845 = vrot.slane %v2844, 4
      %v2846 = vrot.slane %v2055, 5
      %v2847 = vsel %vm792, %v2845, %v2846
      %v2848 = vrot.slane %v2846, 4
      %v2849 = vrot.slane %v2056, 5
      %v2850 = vsel %vm792, %v2848, %v2849
      %v2851 = vrot.slane %v2057, 5
      %v2852 = vrot.slane %v2851, 4
      %v2853 = vrot.slane %v2058, 5
      %v2854 = vsel %vm792, %v2852, %v2853
      %v2855 = vrot.slane %v2853, 4
      %v2856 = vrot.slane %v2059, 5
      %v2857 = vsel %vm792, %v2855, %v2856
      %v2858 = vrot.slane %v2060, 5
      %v2859 = vrot.slane %v2858, 4
      %v2860 = vrot.slane %v2061, 5
      %v2861 = vsel %vm792, %v2859, %v2860
      %v2862 = vrot.slane %v2860, 4
      %v2863 = vrot.slane %v2062, 5
      %v2864 = vsel %vm792, %v2862, %v2863
      %2865 = vrot.lane.b32.xlu0 %v2756, 64
      %v2866 = vpop.permute.xlu0 %2865
      %2867 = vrot.lane.b32.xlu0 %v2759, 64
      %v2868 = vpop.permute.xlu0 %2867
      %2869 = vrot.lane.b32.xlu0 %v2763, 64
      %v2870 = vpop.permute.xlu0 %2869
      %2871 = vrot.lane.b32.xlu0 %v2766, 64
      %v2872 = vpop.permute.xlu0 %2871
      %2873 = vrot.lane.b32.xlu0 %v2770, 64
      %v2874 = vpop.permute.xlu0 %2873
      %2875 = vrot.lane.b32.xlu0 %v2773, 64
      %v2876 = vpop.permute.xlu0 %2875
      %2877 = vrot.lane.b32.xlu0 %v2777, 64
      %v2878 = vpop.permute.xlu0 %2877
      %2879 = vrot.lane.b32.xlu0 %v2780, 64
      %v2880 = vpop.permute.xlu0 %2879
      %2881 = vrot.lane.b32.xlu0 %v2784, 64
      %v2882 = vpop.permute.xlu0 %2881
      %2883 = vrot.lane.b32.xlu0 %v2787, 64
      %v2884 = vpop.permute.xlu0 %2883
      %2885 = vrot.lane.b32.xlu0 %v2791, 64
      %v2886 = vpop.permute.xlu0 %2885
      %2887 = vrot.lane.b32.xlu0 %v2794, 64
      %v2888 = vpop.permute.xlu0 %2887
      %2889 = vrot.lane.b32.xlu0 %v2798, 64
      %v2890 = vpop.permute.xlu0 %2889
      %2891 = vrot.lane.b32.xlu0 %v2801, 64
      %v2892 = vpop.permute.xlu0 %2891
      %2893 = vrot.lane.b32.xlu0 %v2805, 64
      %v2894 = vpop.permute.xlu0 %2893
      %2895 = vrot.lane.b32.xlu0 %v2808, 64
      %v2896 = vpop.permute.xlu0 %2895
      %2897 = vrot.lane.b32.xlu0 %v2812, 64
      %v2898 = vpop.permute.xlu0 %2897
      %2899 = vrot.lane.b32.xlu0 %v2815, 64
      %v2900 = vpop.permute.xlu0 %2899
      %2901 = vrot.lane.b32.xlu0 %v2819, 64
      %v2902 = vpop.permute.xlu0 %2901
      %2903 = vrot.lane.b32.xlu0 %v2822, 64
      %v2904 = vpop.permute.xlu0 %2903
      %2905 = vrot.lane.b32.xlu0 %v2826, 64
      %v2906 = vpop.permute.xlu0 %2905
      %2907 = vrot.lane.b32.xlu0 %v2829, 64
      %v2908 = vpop.permute.xlu0 %2907
      %2909 = vrot.lane.b32.xlu0 %v2833, 64
      %v2910 = vpop.permute.xlu0 %2909
      %2911 = vrot.lane.b32.xlu0 %v2836, 64
      %v2912 = vpop.permute.xlu0 %2911
      %2913 = vrot.lane.b32.xlu0 %v2840, 64
      %v2914 = vpop.permute.xlu0 %2913
      %2915 = vrot.lane.b32.xlu0 %v2843, 64
      %v2916 = vpop.permute.xlu0 %2915
      %2917 = vrot.lane.b32.xlu0 %v2847, 64
      %v2918 = vpop.permute.xlu0 %2917
      %2919 = vrot.lane.b32.xlu0 %v2850, 64
      %v2920 = vpop.permute.xlu0 %2919
      %2921 = vrot.lane.b32.xlu0 %v2854, 64
      %v2922 = vpop.permute.xlu0 %2921
      %2923 = vrot.lane.b32.xlu0 %v2857, 64
      %v2924 = vpop.permute.xlu0 %2923
      %2925 = vrot.lane.b32.xlu0 %v2861, 64
      %v2926 = vpop.permute.xlu0 %2925
      %2927 = vrot.lane.b32.xlu0 %v2864, 64
      %v2928 = vpop.permute.xlu0 %2927
      %vm2961 = vcmask 585216
      %2962 = vst.msk [vmem:[#allocation2] sm:$0xf] %vm2961, %v2866
      %2963 = vst.msk [vmem:[#allocation2 + $0x4] sm:$0xf] %vm2961, %v2868
      %2964 = vst.msk [vmem:[#allocation2 + $0x8] sm:$0xf] %vm2961, %v2870
      %2965 = vst.msk [vmem:[#allocation2 + $0xc] sm:$0xf] %vm2961, %v2872
      %2966 = vst.msk [vmem:[#allocation2 + $0x10] sm:$0xf] %vm2961, %v2874
      %2967 = vst.msk [vmem:[#allocation2 + $0x14] sm:$0xf] %vm2961, %v2876
      %2968 = vst.msk [vmem:[#allocation2 + $0x18] sm:$0xf] %vm2961, %v2878
      %2969 = vst.msk [vmem:[#allocation2 + $0x1c] sm:$0xf] %vm2961, %v2880
      %2970 = vst.msk [vmem:[#allocation2 + $0x20] sm:$0xf] %vm2961, %v2882
      %2971 = vst.msk [vmem:[#allocation2 + $0x24] sm:$0xf] %vm2961, %v2884
      %2972 = vst.msk [vmem:[#allocation2 + $0x28] sm:$0xf] %vm2961, %v2886
      %2973 = vst.msk [vmem:[#allocation2 + $0x2c] sm:$0xf] %vm2961, %v2888
      %2974 = vst.msk [vmem:[#allocation2 + $0x30] sm:$0xf] %vm2961, %v2890
      %2975 = vst.msk [vmem:[#allocation2 + $0x34] sm:$0xf] %vm2961, %v2892
      %2976 = vst.msk [vmem:[#allocation2 + $0x38] sm:$0xf] %vm2961, %v2894
      %2977 = vst.msk [vmem:[#allocation2 + $0x3c] sm:$0xf] %vm2961, %v2896
      %2978 = vst.msk [vmem:[#allocation2 + $0x40] sm:$0xf] %vm2961, %v2898
      %2979 = vst.msk [vmem:[#allocation2 + $0x44] sm:$0xf] %vm2961, %v2900
      %2980 = vst.msk [vmem:[#allocation2 + $0x48] sm:$0xf] %vm2961, %v2902
      %2981 = vst.msk [vmem:[#allocation2 + $0x4c] sm:$0xf] %vm2961, %v2904
      %2982 = vst.msk [vmem:[#allocation2 + $0x50] sm:$0xf] %vm2961, %v2906
      %2983 = vst.msk [vmem:[#allocation2 + $0x54] sm:$0xf] %vm2961, %v2908
      %2984 = vst.msk [vmem:[#allocation2 + $0x58] sm:$0xf] %vm2961, %v2910
      %2985 = vst.msk [vmem:[#allocation2 + $0x5c] sm:$0xf] %vm2961, %v2912
      %2986 = vst.msk [vmem:[#allocation2 + $0x60] sm:$0xf] %vm2961, %v2914
      %2987 = vst.msk [vmem:[#allocation2 + $0x64] sm:$0xf] %vm2961, %v2916
      %2988 = vst.msk [vmem:[#allocation2 + $0x68] sm:$0xf] %vm2961, %v2918
      %2989 = vst.msk [vmem:[#allocation2 + $0x6c] sm:$0xf] %vm2961, %v2920
      %2990 = vst.msk [vmem:[#allocation2 + $0x70] sm:$0xf] %vm2961, %v2922
      %2991 = vst.msk [vmem:[#allocation2 + $0x74] sm:$0xf] %vm2961, %v2924
      %2992 = vst.msk [vmem:[#allocation2 + $0x78] sm:$0xf] %vm2961, %v2926
      %2993 = vst.msk [vmem:[#allocation2 + $0x7c] sm:$0xf] %vm2961, %v2928
      %v2994 = vld [vmem:[#allocation2] sm:$0xf]
      %v2995 = vld [vmem:[#allocation2 + $0x4] sm:$0xf]
      %v2996 = vld [vmem:[#allocation2 + $0x8] sm:$0xf]
      %v2997 = vld [vmem:[#allocation2 + $0xc] sm:$0xf]
      %v2998 = vld [vmem:[#allocation2 + $0x10] sm:$0xf]
      %v2999 = vld [vmem:[#allocation2 + $0x14] sm:$0xf]
      %v3000 = vld [vmem:[#allocation2 + $0x18] sm:$0xf]
      %v3001 = vld [vmem:[#allocation2 + $0x1c] sm:$0xf]
      %v3002 = vld [vmem:[#allocation2 + $0x20] sm:$0xf]
      %v3003 = vld [vmem:[#allocation2 + $0x24] sm:$0xf]
      %v3004 = vld [vmem:[#allocation2 + $0x28] sm:$0xf]
      %v3005 = vld [vmem:[#allocation2 + $0x2c] sm:$0xf]
      %v3006 = vld [vmem:[#allocation2 + $0x30] sm:$0xf]
      %v3007 = vld [vmem:[#allocation2 + $0x34] sm:$0xf]
      %v3008 = vld [vmem:[#allocation2 + $0x38] sm:$0xf]
      %v3009 = vld [vmem:[#allocation2 + $0x3c] sm:$0xf]
      %v3010 = vld [vmem:[#allocation2 + $0x40] sm:$0xf]
      %v3011 = vld [vmem:[#allocation2 + $0x44] sm:$0xf]
      %v3012 = vld [vmem:[#allocation2 + $0x48] sm:$0xf]
      %v3013 = vld [vmem:[#allocation2 + $0x4c] sm:$0xf]
      %v3014 = vld [vmem:[#allocation2 + $0x50] sm:$0xf]
      %v3015 = vld [vmem:[#allocation2 + $0x54] sm:$0xf]
      %v3016 = vld [vmem:[#allocation2 + $0x58] sm:$0xf]
      %v3017 = vld [vmem:[#allocation2 + $0x5c] sm:$0xf]
      %v3018 = vld [vmem:[#allocation2 + $0x60] sm:$0xf]
      %v3019 = vld [vmem:[#allocation2 + $0x64] sm:$0xf]
      %v3020 = vld [vmem:[#allocation2 + $0x68] sm:$0xf]
      %v3021 = vld [vmem:[#allocation2 + $0x6c] sm:$0xf]
      %v3022 = vld [vmem:[#allocation2 + $0x70] sm:$0xf]
      %v3023 = vld [vmem:[#allocation2 + $0x74] sm:$0xf]
      %v3024 = vld [vmem:[#allocation2 + $0x78] sm:$0xf]
      %v3025 = vld [vmem:[#allocation2 + $0x7c] sm:$0xf]
      %v3026 = vld [vmem:[%s1] sm:$0xf]
      %v3027 = vld [vmem:[%s1 + $0x4] sm:$0xf]
      %v3028 = vld [vmem:[%s1 + $0x8] sm:$0xf]
      %v3029 = vld [vmem:[%s1 + $0xc] sm:$0xf]
      %v3030 = vld [vmem:[%s1 + $0x10] sm:$0xf]
      %v3031 = vld [vmem:[%s1 + $0x14] sm:$0xf]
      %v3032 = vld [vmem:[%s1 + $0x18] sm:$0xf]
      %v3033 = vld [vmem:[%s1 + $0x1c] sm:$0xf]
      %v3034 = vld [vmem:[%s1 + $0x20] sm:$0xf]
      %v3067 = vunpack.c.l.b16 %v2994
      %v3068 = vunpack.c.l.b16 %v2995
      %v3069 = vunpack.c.l.b16 %v2996
      %v3070 = vunpack.c.l.b16 %v2997
      %v3071 = vunpack.c.l.b16 %v2998
      %v3072 = vunpack.c.l.b16 %v2999
      %v3073 = vunpack.c.l.b16 %v3000
      %v3074 = vunpack.c.l.b16 %v3001
      %v3075 = vunpack.c.l.b16 %v3002
      %v3076 = vunpack.c.l.b16 %v3003
      %v3077 = vunpack.c.l.b16 %v3004
      %v3078 = vunpack.c.l.b16 %v3005
      %v3079 = vunpack.c.l.b16 %v3006
      %v3080 = vunpack.c.l.b16 %v3007
      %v3081 = vunpack.c.l.b16 %v3008
      %v3082 = vunpack.c.l.b16 %v3009
      %v3083 = vunpack.c.l.b16 %v3010
      %v3084 = vunpack.c.l.b16 %v3011
      %v3085 = vunpack.c.l.b16 %v3012
      %v3086 = vunpack.c.l.b16 %v3013
      %v3087 = vunpack.c.l.b16 %v3014
      %v3088 = vunpack.c.l.b16 %v3015
      %v3089 = vunpack.c.l.b16 %v3016
      %v3090 = vunpack.c.l.b16 %v3017
      %v3091 = vunpack.c.l.b16 %v3018
      %v3092 = vunpack.c.l.b16 %v3019
      %v3093 = vunpack.c.l.b16 %v3020
      %v3094 = vunpack.c.l.b16 %v3021
      %v3095 = vunpack.c.l.b16 %v3022
      %v3096 = vunpack.c.l.b16 %v3023
      %v3097 = vunpack.c.l.b16 %v3024
      %v3098 = vunpack.c.l.b16 %v3025
      %v3099 = vpack.c.b16 %v3068, %v3067
      %v3100 = vpack.c.b16 %v3070, %v3069
      %v3101 = vpack.c.b16 %v3072, %v3071
      %v3102 = vpack.c.b16 %v3074, %v3073
      %v3103 = vpack.c.b16 %v3076, %v3075
      %v3104 = vpack.c.b16 %v3078, %v3077
      %v3105 = vpack.c.b16 %v3080, %v3079
      %v3106 = vpack.c.b16 %v3082, %v3081
      %v3107 = vpack.c.b16 %v3084, %v3083
      %v3108 = vpack.c.b16 %v3086, %v3085
      %v3109 = vpack.c.b16 %v3088, %v3087
      %v3110 = vpack.c.b16 %v3090, %v3089
      %v3111 = vpack.c.b16 %v3092, %v3091
      %v3112 = vpack.c.b16 %v3094, %v3093
      %v3113 = vpack.c.b16 %v3096, %v3095
      %v3114 = vpack.c.b16 %v3098, %v3097
      %v3124 = vunpack.c.l.b16 %v3026
      %v3125 = vunpack.c.l.b16 %v3027
      %v3126 = vunpack.c.l.b16 %v3028
      %v3127 = vunpack.c.l.b16 %v3029
      %v3128 = vunpack.c.l.b16 %v3030
      %v3129 = vunpack.c.l.b16 %v3031
      %v3130 = vunpack.c.l.b16 %v3032
      %v3131 = vunpack.c.l.b16 %v3033
      %v3132 = vunpack.c.l.b16 %v3034
      %v3133 = vpack.c.b16 %v3125, %v3124
      %v3134 = vpack.c.b16 %v3127, %v3126
      %v3135 = vpack.c.b16 %v3129, %v3128
      %v3136 = vpack.c.b16 %v3131, %v3130
      %v3137 = vpack.c.b16 %v3132, %v3132
      %vm3142 = vcmask 588800
      %v3144 = vsel %vm3142, %v3099, 0
      %v3147 = vsel %vm3142, %v3100, 0
      %v3150 = vsel %vm3142, %v3101, 0
      %v3153 = vsel %vm3142, %v3102, 0
      %v3156 = vsel %vm3142, %v3103, 0
      %v3159 = vsel %vm3142, %v3104, 0
      %v3162 = vsel %vm3142, %v3105, 0
      %v3165 = vsel %vm3142, %v3106, 0
      %v3168 = vsel %vm3142, %v3107, 0
      %v3171 = vsel %vm3142, %v3108, 0
      %v3174 = vsel %vm3142, %v3109, 0
      %v3177 = vsel %vm3142, %v3110, 0
      %v3180 = vsel %vm3142, %v3111, 0
      %v3183 = vsel %vm3142, %v3112, 0
      %v3186 = vsel %vm3142, %v3113, 0
      %v3189 = vsel %vm3142, %v3114, 0
      %vm3191 = vcmask 1043456
      %v3193 = vsel %vm3191, %v3137, 0
      %3195 = vmatpush.bf16.msra.mxu0 0
      %3196 = vmatpush.bf16.msra.mxu0 0
      %3197 = vmatpush.bf16.msra.mxu0 0
      %3198 = vmatpush.bf16.msra.mxu0 %v3193
      %3199 = vmatpush.bf16.msra.mxu0 %v3136
      %3200 = vmatpush.bf16.msra.mxu0 %v3135
      %3201 = vmatpush.bf16.msra.mxu0 %v3134
      %3202 = vmatpush.bf16.msra.mxu0 %v3133
      %3203 = vmatmul.bf16.gmra.mxu0 %v3144
      %v3204 = vpop.f32.mrf.mxu0
      %v3205 = vadd.f32 0.0, %v3204
      %v3206 = vpop.f32.mrf.mxu0
      %v3207 = vadd.f32 0.0, %v3206
      %3208 = vmatmul.bf16.gmra.mxu0 %v3147
      %v3209 = vpop.f32.mrf.mxu0
      %v3210 = vadd.f32 0.0, %v3209
      %v3211 = vpop.f32.mrf.mxu0
      %v3212 = vadd.f32 0.0, %v3211
      %3213 = vmatmul.bf16.gmra.mxu0 %v3150
      %v3214 = vpop.f32.mrf.mxu0
      %v3215 = vadd.f32 0.0, %v3214
      %v3216 = vpop.f32.mrf.mxu0
      %v3217 = vadd.f32 0.0, %v3216
      %3218 = vmatmul.bf16.gmra.mxu0 %v3153
      %v3219 = vpop.f32.mrf.mxu0
      %v3220 = vadd.f32 0.0, %v3219
      %v3221 = vpop.f32.mrf.mxu0
      %v3222 = vadd.f32 0.0, %v3221
      %3223 = vmatmul.bf16.gmra.mxu0 %v3156
      %v3224 = vpop.f32.mrf.mxu0
      %v3225 = vadd.f32 0.0, %v3224
      %v3226 = vpop.f32.mrf.mxu0
      %v3227 = vadd.f32 0.0, %v3226
      %3228 = vmatmul.bf16.gmra.mxu0 %v3159
      %v3229 = vpop.f32.mrf.mxu0
      %v3230 = vadd.f32 0.0, %v3229
      %v3231 = vpop.f32.mrf.mxu0
      %v3232 = vadd.f32 0.0, %v3231
      %3233 = vmatmul.bf16.gmra.mxu0 %v3162
      %v3234 = vpop.f32.mrf.mxu0
      %v3235 = vadd.f32 0.0, %v3234
      %v3236 = vpop.f32.mrf.mxu0
      %v3237 = vadd.f32 0.0, %v3236
      %3238 = vmatmul.bf16.gmra.mxu0 %v3165
      %v3239 = vpop.f32.mrf.mxu0
      %v3240 = vadd.f32 0.0, %v3239
      %v3241 = vpop.f32.mrf.mxu0
      %v3242 = vadd.f32 0.0, %v3241
      %3243 = vmatmul.bf16.gmra.mxu0 %v3168
      %v3244 = vpop.f32.mrf.mxu0
      %v3245 = vadd.f32 0.0, %v3244
      %v3246 = vpop.f32.mrf.mxu0
      %v3247 = vadd.f32 0.0, %v3246
      %3248 = vmatmul.bf16.gmra.mxu0 %v3171
      %v3249 = vpop.f32.mrf.mxu0
      %v3250 = vadd.f32 0.0, %v3249
      %v3251 = vpop.f32.mrf.mxu0
      %v3252 = vadd.f32 0.0, %v3251
      %3253 = vmatmul.bf16.gmra.mxu0 %v3174
      %v3254 = vpop.f32.mrf.mxu0
      %v3255 = vadd.f32 0.0, %v3254
      %v3256 = vpop.f32.mrf.mxu0
      %v3257 = vadd.f32 0.0, %v3256
      %3258 = vmatmul.bf16.gmra.mxu0 %v3177
      %v3259 = vpop.f32.mrf.mxu0
      %v3260 = vadd.f32 0.0, %v3259
      %v3261 = vpop.f32.mrf.mxu0
      %v3262 = vadd.f32 0.0, %v3261
      %3263 = vmatmul.bf16.gmra.mxu0 %v3180
      %v3264 = vpop.f32.mrf.mxu0
      %v3265 = vadd.f32 0.0, %v3264
      %v3266 = vpop.f32.mrf.mxu0
      %v3267 = vadd.f32 0.0, %v3266
      %3268 = vmatmul.bf16.gmra.mxu0 %v3183
      %v3269 = vpop.f32.mrf.mxu0
      %v3270 = vadd.f32 0.0, %v3269
      %v3271 = vpop.f32.mrf.mxu0
      %v3272 = vadd.f32 0.0, %v3271
      %3273 = vmatmul.bf16.gmra.mxu0 %v3186
      %v3274 = vpop.f32.mrf.mxu0
      %v3275 = vadd.f32 0.0, %v3274
      %v3276 = vpop.f32.mrf.mxu0
      %v3277 = vadd.f32 0.0, %v3276
      %3278 = vmatmul.bf16.gmra.mxu0 %v3189
      %v3279 = vpop.f32.mrf.mxu0
      %v3280 = vadd.f32 0.0, %v3279
      %v3281 = vpop.f32.mrf.mxu0
      %v3282 = vadd.f32 0.0, %v3281
      %3283 = vdwg.mxu0
      %3284 = vst [vmem:[%s143] sm:$0xff] %v3205
      %3285 = vst [vmem:[%s143 + $0x8] sm:$0xff] %v3207
      %3286 = vst [vmem:[%s143 + $0x10] sm:$0xff] %v3210
      %3287 = vst [vmem:[%s143 + $0x18] sm:$0xff] %v3212
      %3288 = vst [vmem:[%s143 + $0x20] sm:$0xff] %v3215
      %3289 = vst [vmem:[%s143 + $0x28] sm:$0xff] %v3217
      %3290 = vst [vmem:[%s143 + $0x30] sm:$0xff] %v3220
      %3291 = vst [vmem:[%s143 + $0x38] sm:$0xff] %v3222
      %3292 = vst [vmem:[%s143 + $0x40] sm:$0xff] %v3225
      %3293 = vst [vmem:[%s143 + $0x48] sm:$0xff] %v3227
      %3294 = vst [vmem:[%s143 + $0x50] sm:$0xff] %v3230
      %3295 = vst [vmem:[%s143 + $0x58] sm:$0xff] %v3232
      %3296 = vst [vmem:[%s143 + $0x60] sm:$0xff] %v3235
      %3297 = vst [vmem:[%s143 + $0x68] sm:$0xff] %v3237
      %3298 = vst [vmem:[%s143 + $0x70] sm:$0xff] %v3240
      %3299 = vst [vmem:[%s143 + $0x78] sm:$0xff] %v3242
      %3300 = vst [vmem:[%s143 + $0x80] sm:$0xff] %v3245
      %3301 = vst [vmem:[%s143 + $0x88] sm:$0xff] %v3247
      %3302 = vst [vmem:[%s143 + $0x90] sm:$0xff] %v3250
      %3303 = vst [vmem:[%s143 + $0x98] sm:$0xff] %v3252
      %3304 = vst [vmem:[%s143 + $0xa0] sm:$0xff] %v3255
      %3305 = vst [vmem:[%s143 + $0xa8] sm:$0xff] %v3257
      %3306 = vst [vmem:[%s143 + $0xb0] sm:$0xff] %v3260
      %3307 = vst [vmem:[%s143 + $0xb8] sm:$0xff] %v3262
      %3308 = vst [vmem:[%s143 + $0xc0] sm:$0xff] %v3265
      %3309 = vst [vmem:[%s143 + $0xc8] sm:$0xff] %v3267
      %3310 = vst [vmem:[%s143 + $0xd0] sm:$0xff] %v3270
      %3311 = vst [vmem:[%s143 + $0xd8] sm:$0xff] %v3272
      %3312 = vst [vmem:[%s143 + $0xe0] sm:$0xff] %v3275
      %3313 = vst [vmem:[%s143 + $0xe8] sm:$0xff] %v3277
      %3314 = vst [vmem:[%s143 + $0xf0] sm:$0xff] %v3280
      %3315 = vst [vmem:[%s143 + $0xf8] sm:$0xff] %v3282
      %p3316 = scmp.lt.s32.totalorder %s13, 1
      %s3317 = scalar_select %p3316, %s13, 1
      %s3318 = smul.addr %s3317, 32
      %s3319 = smul.addr %s3318, 8
      %s3320 = scalar_lea.vmem %s2, %s3319
      // Predicated region
      $region29: #{deconv_layer_forward.1} parent=27 // pred_check
        %p3321 = pneg %p78
      $region30: #{deconv_layer_forward.1} parent=27 // pred_check_branch
        %3323 = sbr.rel (%p3321) target = $region32
      $region31: #{deconv_layer_forward.1} parent=27 // pred_region
        _
      $region32: #{deconv_layer_forward.1} parent=27 // pred_fallthru
        _
    $region28: #{deconv_layer_forward.1} parent=5 // pred_fallthru
      _
    %p3324 = scmp.le.s32.totalorder 2, %s8
    // Predicated region
    $region33: #{deconv_layer_forward.1} parent=5 // pred_check
      %p3325 = pneg %p3324
    $region34: #{deconv_layer_forward.1} parent=5 // pred_check_branch
      %3327 = sbr.rel (%p3325) target = $region36
    $region35: #{deconv_layer_forward.1} parent=5 // pred_region
      %s3328 = ssub.s32 %s8, 2
      // Predicated region
      $region37: #{deconv_layer_forward.1} parent=35 // pred_check
        %p3329 = pneg %p84
      $region38: #{deconv_layer_forward.1} parent=35 // pred_check_branch
        %3331 = sbr.rel (%p3329) target = $region40
      $region39: #{deconv_layer_forward.1} parent=35 // pred_region
        %p3332 = scmp.lt.s32.totalorder %s14, 1
        %s3333 = scalar_select %p3332, %s14, 1
        %s3334 = smul.addr %s3333, 32
        %s3335 = smul.addr %s3334, 8
        %s3336 = scalar_lea.vmem %s2, %s3335
      $region40: #{deconv_layer_forward.1} parent=35 // pred_fallthru
        _
    $region36: #{deconv_layer_forward.1} parent=5 // pred_fallthru
      _
  $region6: #{deconv_layer_forward.1} parent=0 // loop_footer
    %s12 = sadd.s32 1, %s8
  $region7: #{deconv_layer_forward.1} parent=0 // loop_footer_branch
    %7 = sbr.rel target = $region3
  $region8: #{deconv_layer_forward.1} parent=0 // loop_exit
    _

</llo_original>
